<compile_context>
chip_gen: v7x
topology: tpu7x:2x2x1
jax: 0.10.0
libtpu: 0.0.40
codegen_flags: <defaults>
</compile_context>

<pallas_src>
import functools

import jax
import jax.numpy as jnp
from jax.experimental import pallas as pl
from jax.experimental.pallas import tpu as pltpu

NEG_SLOPE = 0.01          # F.leaky_relu default negative_slope
SINGLE_STEP_MAX_B = 512   # run one grid step up to this padded batch
TILE_B_MAX = 1024         # max batch tile for large-batch calls


def _leaky_relu(v):
    # max(v, slope*v) == leaky_relu(v) for 0 < slope < 1 ; 2 VALU ops.
    return jnp.maximum(v, NEG_SLOPE * v)


def actor_kernel(x_ref,
                 w1_ref, s1_ref, b1_ref,
                 w2_ref, s2_ref, b2_ref,
                 w3_ref, s3_ref, b3_ref,
                 w4_ref, b4_ref,
                 o_ref):
    """Fused 4-layer MLP: three leaky-relu hidden layers + tanh output head.

    w1/w2/w3 arrive as int8 (per-output-channel f32 scales s1/s2/s3); they are
    cast to bf16 (exact for |q| <= 127) for the MXU, accumulated in f32, and
    the scale is applied to the (tile_b, 512) result.  w4 is bf16.  Bias adds
    and nonlinearities run in f32 on the VPU/EUP (hidden under weight DMA).
    """
    x = x_ref[...].astype(jnp.bfloat16)

    w1 = w1_ref[...].astype(jnp.float32).astype(jnp.bfloat16)
    h = jnp.dot(x, w1, preferred_element_type=jnp.float32)
    h = _leaky_relu(h * s1_ref[...] + b1_ref[...])

    w2 = w2_ref[...].astype(jnp.float32).astype(jnp.bfloat16)
    h = jnp.dot(h.astype(jnp.bfloat16), w2, preferred_element_type=jnp.float32)
    h = _leaky_relu(h * s2_ref[...] + b2_ref[...])

    w3 = w3_ref[...].astype(jnp.float32).astype(jnp.bfloat16)
    h = jnp.dot(h.astype(jnp.bfloat16), w3, preferred_element_type=jnp.float32)
    h = _leaky_relu(h * s3_ref[...] + b3_ref[...])

    o = jnp.dot(h.astype(jnp.bfloat16), w4_ref[...],
                preferred_element_type=jnp.float32) + b4_ref[...]
    o_ref[...] = jnp.tanh(o)


def _round_up(n, m):
    return -(-n // m) * m


def _pad_to(x, axis, target):
    pad = target - x.shape[axis]
    if pad <= 0:
        return x
    widths = [(0, 0)] * x.ndim
    widths[axis] = (0, pad)
    return jnp.pad(x, widths)


def init_actor_params(key, state_size, action_size, hidden=512):
    """Deterministic f32 init mirroring the PyTorch module's reset_parameters().

    hidden_init() in the reference uses weight.size()[0] == out_features as
    'fan_in' (a quirk of the original code); we reproduce that: hidden-layer
    weights are uniform(+-1/sqrt(512)).  Biases keep PyTorch's default Linear
    init uniform(+-1/sqrt(in_features)).  Weights are stored pre-transposed as
    [in, out] so the kernel computes y = x @ W + b.
    """
    ks = jax.random.split(key, 8)

    def u(k, shape, lim):
        return jax.random.uniform(k, shape, jnp.float32, -lim, lim)

    lim_h = 1.0 / jnp.sqrt(float(hidden))
    w1 = u(ks[0], (state_size, hidden), lim_h)
    b1 = u(ks[1], (1, hidden), 1.0 / jnp.sqrt(float(state_size)))
    w2 = u(ks[2], (hidden, hidden), lim_h)
    b2 = u(ks[3], (1, hidden), 1.0 / jnp.sqrt(float(hidden)))
    w3 = u(ks[4], (hidden, hidden), lim_h)
    b3 = u(ks[5], (1, hidden), 1.0 / jnp.sqrt(float(hidden)))
    w4 = u(ks[6], (hidden, action_size), 0.003)
    b4 = u(ks[7], (1, action_size), 1.0 / jnp.sqrt(float(hidden)))
    return (w1, b1, w2, b2, w3, b3, w4, b4)


def _quant_int8_per_col(w):
    """Per-output-channel symmetric int8 quantization: w ~= q * scale."""
    absmax = jnp.max(jnp.abs(w), axis=0, keepdims=True)        # (1, out)
    scale = jnp.maximum(absmax, 1e-8) / 127.0
    q = jnp.clip(jnp.round(w / scale), -127, 127).astype(jnp.int8)
    return q, scale.astype(jnp.float32)


def prepare_actor_params(params):
    """One-time prep (off the hot path): zero-pad ragged feature dims to 128
    lanes, int8-quantize the hidden-layer weights (per-output-channel scales),
    keep the small accuracy-sensitive fc4 weight in bf16 and all biases in f32.
    """
    w1, b1, w2, b2, w3, b3, w4, b4 = params
    S_pad = max(128, _round_up(w1.shape[0], 128))
    A_pad = max(128, _round_up(w4.shape[1], 128))

    w1_q, s1 = _quant_int8_per_col(_pad_to(w1, 0, S_pad))
    w2_q, s2 = _quant_int8_per_col(w2)
    w3_q, s3 = _quant_int8_per_col(w3)
    w4_p = _pad_to(w4, 1, A_pad).astype(jnp.bfloat16)
    b4_p = _pad_to(b4, 1, A_pad)
    return (w1_q, s1, b1, w2_q, s2, b2, w3_q, s3, b3, w4_p, b4_p)


def _choose_batch_tiling(B):
    """Pick (tile_b, B_pad) from the (static) batch size."""
    B8 = max(8, _round_up(B, 8))
    if B8 <= SINGLE_STEP_MAX_B:
        # Tiny/moderate batch: single step; do NOT split across cores (each
        # core would re-fetch the full weight set in a weight-DMA-bound regime).
        return B8, B8
    if B8 <= 2 * TILE_B_MAX:
        # Exactly two tiles (<= 8 padded rows): both v7x TensorCores get work.
        tile_b = _round_up((B8 + 1) // 2, 8)
        return tile_b, 2 * tile_b
    # Large batch: biggest tile with the least padded-row waste.
    candidates = (1024, 896, 768, 640, 512)
    tile_b = min(candidates, key=lambda t: (_round_up(B8, t) - B8, -t))
    return tile_b, _round_up(B8, tile_b)


@functools.partial(jax.jit, static_argnames=("action_size",))
def actor_forward(state, prepared_params, action_size):
    """state: [B, state_size] f32 -> actions: [B, action_size] f32."""
    (w1, s1, b1, w2, s2, b2, w3, s3, b3, w4, b4) = prepared_params
    B, state_size = state.shape
    S_pad, H = w1.shape
    A_pad = w4.shape[1]

    tile_b, B_pad = _choose_batch_tiling(B)

    x_p = state
    if B_pad > B or S_pad > state_size:
        x_p = jnp.pad(state, ((0, B_pad - B), (0, S_pad - state_size)))

    grid = (B_pad // tile_b,)

    # Weights/biases/scales: constant index_map -> VMEM-resident across tiles.
    const = lambda shape: pl.BlockSpec(shape, lambda i: (0, 0))

    out = pl.pallas_call(
        actor_kernel,
        out_shape=jax.ShapeDtypeStruct((B_pad, A_pad), jnp.float32),
        grid=grid,
        in_specs=[
            pl.BlockSpec((tile_b, S_pad), lambda i: (i, 0)),          # state tile
            const((S_pad, H)), const((1, H)), const((1, H)),          # fc1 w/s/b
            const((H, H)), const((1, H)), const((1, H)),              # fc2 w/s/b
            const((H, H)), const((1, H)), const((1, H)),              # fc3 w/s/b
            const((H, A_pad)), const((1, A_pad)),                     # fc4 w/b
        ],
        out_specs=pl.BlockSpec((tile_b, A_pad), lambda i: (i, 0)),
        compiler_params=pltpu.CompilerParams(
            dimension_semantics=("parallel",),
            vmem_limit_bytes=32 << 20,
        ),
    )(x_p, w1, s1, b1, w2, s2, b2, w3, s3, b3, w4, b4)

    return out[:B, :action_size]


def _reference_forward(state, params_f32):
    """Pure-JAX f32 reference (original, un-quantized params)."""
    w1, b1, w2, b2, w3, b3, w4, b4 = params_f32
    lrelu = lambda v: jnp.where(v > 0, v, NEG_SLOPE * v)
    h = lrelu(state @ w1 + b1)
    h = lrelu(h @ w2 + b2)
    h = lrelu(h @ w3 + b3)
    return jnp.tanh(h @ w4 + b4)


if __name__ == "__main__":
    state_size = 33    # Reacher environment state dim
    action_size = 4    # Reacher environment action dim

    key = jax.random.PRNGKey(0)
    k_params, k_small, k_large = jax.random.split(key, 3)
    params_f32 = init_actor_params(k_params, state_size, action_size)
    prepared = prepare_actor_params(params_f32)

    # Small-batch (rollout) path: single grid step.
    state_small = jax.random.normal(k_small, (8, state_size), jnp.float32)
    act_small = jax.block_until_ready(
        actor_forward(state_small, prepared, action_size=action_size))
    ref_small = _reference_forward(state_small, params_f32)
    assert act_small.shape == (8, action_size)
    assert jnp.allclose(act_small, ref_small, atol=2e-2, rtol=2e-2), (
        f"small-batch max abs err {jnp.max(jnp.abs(act_small - ref_small))}")

    # Larger batch: exercises the 2-tile (grid=(2,)) path.
    state_large = jax.random.normal(k_large, (600, state_size), jnp.float32)
    act_large = jax.block_until_ready(
        actor_forward(state_large, prepared, action_size=action_size))
    ref_large = _reference_forward(state_large, params_f32)
    assert act_large.shape == (600, action_size)
    assert jnp.allclose(act_large, ref_large, atol=2e-2, rtol=2e-2), (
        f"large-batch max abs err {jnp.max(jnp.abs(act_large - ref_large))}")

    print("KERNEL_OK")
</pallas_src>

<mosaic_0001>
module attributes {stable_mosaic.version = 11 : i64} {
  func.func @actor_kernel(%arg0: i32, %arg1: memref<8x128xf32, #tpu.memory_space<vmem>>, %arg2: memref<128x512xi8, #tpu.memory_space<vmem>>, %arg3: memref<1x512xf32, #tpu.memory_space<vmem>>, %arg4: memref<1x512xf32, #tpu.memory_space<vmem>>, %arg5: memref<512x512xi8, #tpu.memory_space<vmem>>, %arg6: memref<1x512xf32, #tpu.memory_space<vmem>>, %arg7: memref<1x512xf32, #tpu.memory_space<vmem>>, %arg8: memref<512x512xi8, #tpu.memory_space<vmem>>, %arg9: memref<1x512xf32, #tpu.memory_space<vmem>>, %arg10: memref<1x512xf32, #tpu.memory_space<vmem>>, %arg11: memref<512x128xbf16, #tpu.memory_space<vmem>>, %arg12: memref<1x128xf32, #tpu.memory_space<vmem>>, %arg13: memref<8x128xf32, #tpu.memory_space<vmem>>) attributes {dimension_semantics = [#tpu.dimension_semantics<parallel>], iteration_bounds = array<i64: 1>, scalar_prefetch = 0 : i64, scratch_operands = 0 : i64, tpu.core_type = #tpu.core_type<tc>, window_params = [{transform_indices = @transform_0, window_bounds = array<i64: 8, 128>}, {pipeline_mode = #tpu.pipeline_mode<synchronous>, transform_indices = @transform_1, window_bounds = array<i64: 128, 512>}, {pipeline_mode = #tpu.pipeline_mode<synchronous>, transform_indices = @transform_2, window_bounds = array<i64: 1, 512>}, {pipeline_mode = #tpu.pipeline_mode<synchronous>, transform_indices = @transform_3, window_bounds = array<i64: 1, 512>}, {pipeline_mode = #tpu.pipeline_mode<synchronous>, transform_indices = @transform_4, window_bounds = array<i64: 512, 512>}, {pipeline_mode = #tpu.pipeline_mode<synchronous>, transform_indices = @transform_5, window_bounds = array<i64: 1, 512>}, {pipeline_mode = #tpu.pipeline_mode<synchronous>, transform_indices = @transform_6, window_bounds = array<i64: 1, 512>}, {pipeline_mode = #tpu.pipeline_mode<synchronous>, transform_indices = @transform_7, window_bounds = array<i64: 512, 512>}, {pipeline_mode = #tpu.pipeline_mode<synchronous>, transform_indices = @transform_8, window_bounds = array<i64: 1, 512>}, {pipeline_mode = #tpu.pipeline_mode<synchronous>, transform_indices = @transform_9, window_bounds = array<i64: 1, 512>}, {pipeline_mode = #tpu.pipeline_mode<synchronous>, transform_indices = @transform_10, window_bounds = array<i64: 512, 128>}, {pipeline_mode = #tpu.pipeline_mode<synchronous>, transform_indices = @transform_11, window_bounds = array<i64: 1, 128>}, {transform_indices = @transform_12, window_bounds = array<i64: 8, 128>}]} {
    %c0 = arith.constant 0 : index
    %c0_0 = arith.constant 0 : index
    %0 = vector.load %arg1[%c0, %c0_0] : memref<8x128xf32, #tpu.memory_space<vmem>>, vector<8x128xf32>
    %1 = arith.truncf %0 : vector<8x128xf32> to vector<8x128xbf16>
    %c0_1 = arith.constant 0 : index
    %c0_2 = arith.constant 0 : index
    %2 = vector.load %arg2[%c0_1, %c0_2] : memref<128x512xi8, #tpu.memory_space<vmem>>, vector<128x512xi8>
    %3 = arith.sitofp %2 : vector<128x512xi8> to vector<128x512xf32>
    %4 = arith.truncf %3 : vector<128x512xf32> to vector<128x512xbf16>
    %cst = arith.constant dense<0.000000e+00> : vector<8x512xf32>
    %5 = tpu.matmul %1, %4, %cst {dimension_numbers = #tpu.dot_dimension_numbers<[1], [0], [0], [1], [0, 0, 1, 1], [], []>} : vector<8x128xbf16>, vector<128x512xbf16>, vector<8x512xf32> -> vector<8x512xf32>
    %c0_3 = arith.constant 0 : index
    %c0_4 = arith.constant 0 : index
    %6 = vector.load %arg3[%c0_3, %c0_4] : memref<1x512xf32, #tpu.memory_space<vmem>>, vector<1x512xf32>
    %7 = vector.broadcast %6 : vector<1x512xf32> to vector<8x512xf32>
    %8 = arith.mulf %5, %7 : vector<8x512xf32>
    %c0_5 = arith.constant 0 : index
    %c0_6 = arith.constant 0 : index
    %9 = vector.load %arg4[%c0_5, %c0_6] : memref<1x512xf32, #tpu.memory_space<vmem>>, vector<1x512xf32>
    %10 = vector.broadcast %9 : vector<1x512xf32> to vector<8x512xf32>
    %11 = arith.addf %8, %10 : vector<8x512xf32>
    %cst_7 = arith.constant 0.00999999977 : f32
    %12 = vector.broadcast %cst_7 : f32 to vector<8x512xf32>
    %13 = arith.mulf %12, %11 : vector<8x512xf32>
    %14 = arith.maximumf %11, %13 : vector<8x512xf32>
    %c0_8 = arith.constant 0 : index
    %c0_9 = arith.constant 0 : index
    %15 = vector.load %arg5[%c0_8, %c0_9] : memref<512x512xi8, #tpu.memory_space<vmem>>, vector<512x512xi8>
    %16 = arith.sitofp %15 : vector<512x512xi8> to vector<512x512xf32>
    %17 = arith.truncf %16 : vector<512x512xf32> to vector<512x512xbf16>
    %18 = arith.truncf %14 : vector<8x512xf32> to vector<8x512xbf16>
    %cst_10 = arith.constant dense<0.000000e+00> : vector<8x512xf32>
    %19 = tpu.matmul %18, %17, %cst_10 {dimension_numbers = #tpu.dot_dimension_numbers<[1], [0], [0], [1], [0, 0, 1, 1], [], []>} : vector<8x512xbf16>, vector<512x512xbf16>, vector<8x512xf32> -> vector<8x512xf32>
    %c0_11 = arith.constant 0 : index
    %c0_12 = arith.constant 0 : index
    %20 = vector.load %arg6[%c0_11, %c0_12] : memref<1x512xf32, #tpu.memory_space<vmem>>, vector<1x512xf32>
    %21 = vector.broadcast %20 : vector<1x512xf32> to vector<8x512xf32>
    %22 = arith.mulf %19, %21 : vector<8x512xf32>
    %c0_13 = arith.constant 0 : index
    %c0_14 = arith.constant 0 : index
    %23 = vector.load %arg7[%c0_13, %c0_14] : memref<1x512xf32, #tpu.memory_space<vmem>>, vector<1x512xf32>
    %24 = vector.broadcast %23 : vector<1x512xf32> to vector<8x512xf32>
    %25 = arith.addf %22, %24 : vector<8x512xf32>
    %cst_15 = arith.constant 0.00999999977 : f32
    %26 = vector.broadcast %cst_15 : f32 to vector<8x512xf32>
    %27 = arith.mulf %26, %25 : vector<8x512xf32>
    %28 = arith.maximumf %25, %27 : vector<8x512xf32>
    %c0_16 = arith.constant 0 : index
    %c0_17 = arith.constant 0 : index
    %29 = vector.load %arg8[%c0_16, %c0_17] : memref<512x512xi8, #tpu.memory_space<vmem>>, vector<512x512xi8>
    %30 = arith.sitofp %29 : vector<512x512xi8> to vector<512x512xf32>
    %31 = arith.truncf %30 : vector<512x512xf32> to vector<512x512xbf16>
    %32 = arith.truncf %28 : vector<8x512xf32> to vector<8x512xbf16>
    %cst_18 = arith.constant dense<0.000000e+00> : vector<8x512xf32>
    %33 = tpu.matmul %32, %31, %cst_18 {dimension_numbers = #tpu.dot_dimension_numbers<[1], [0], [0], [1], [0, 0, 1, 1], [], []>} : vector<8x512xbf16>, vector<512x512xbf16>, vector<8x512xf32> -> vector<8x512xf32>
    %c0_19 = arith.constant 0 : index
    %c0_20 = arith.constant 0 : index
    %34 = vector.load %arg9[%c0_19, %c0_20] : memref<1x512xf32, #tpu.memory_space<vmem>>, vector<1x512xf32>
    %35 = vector.broadcast %34 : vector<1x512xf32> to vector<8x512xf32>
    %36 = arith.mulf %33, %35 : vector<8x512xf32>
    %c0_21 = arith.constant 0 : index
    %c0_22 = arith.constant 0 : index
    %37 = vector.load %arg10[%c0_21, %c0_22] : memref<1x512xf32, #tpu.memory_space<vmem>>, vector<1x512xf32>
    %38 = vector.broadcast %37 : vector<1x512xf32> to vector<8x512xf32>
    %39 = arith.addf %36, %38 : vector<8x512xf32>
    %cst_23 = arith.constant 0.00999999977 : f32
    %40 = vector.broadcast %cst_23 : f32 to vector<8x512xf32>
    %41 = arith.mulf %40, %39 : vector<8x512xf32>
    %42 = arith.maximumf %39, %41 : vector<8x512xf32>
    %43 = arith.truncf %42 : vector<8x512xf32> to vector<8x512xbf16>
    %c0_24 = arith.constant 0 : index
    %c0_25 = arith.constant 0 : index
    %44 = vector.load %arg11[%c0_24, %c0_25] : memref<512x128xbf16, #tpu.memory_space<vmem>>, vector<512x128xbf16>
    %cst_26 = arith.constant dense<0.000000e+00> : vector<8x128xf32>
    %45 = tpu.matmul %43, %44, %cst_26 {dimension_numbers = #tpu.dot_dimension_numbers<[1], [0], [0], [1], [0, 0, 1, 1], [], []>} : vector<8x512xbf16>, vector<512x128xbf16>, vector<8x128xf32> -> vector<8x128xf32>
    %c0_27 = arith.constant 0 : index
    %c0_28 = arith.constant 0 : index
    %46 = vector.load %arg12[%c0_27, %c0_28] : memref<1x128xf32, #tpu.memory_space<vmem>>, vector<1x128xf32>
    %47 = vector.broadcast %46 : vector<1x128xf32> to vector<8x128xf32>
    %48 = arith.addf %45, %47 : vector<8x128xf32>
    %49 = math.tanh %48 : vector<8x128xf32>
    %c0_29 = arith.constant 0 : index
    %c0_30 = arith.constant 0 : index
    %50 = vector.load %arg13[%c0_29, %c0_30] : memref<8x128xf32, #tpu.memory_space<vmem>>, vector<8x128xf32>
    tpu.vector_store %arg13[%c0_29, %c0_30], %49 {strides = array<i32>} : memref<8x128xf32, #tpu.memory_space<vmem>>, vector<8x128xf32>,
    return
  }
  func.func @transform_0(%arg0: i32) -> (i32, i32) {
    %c0_i32 = arith.constant 0 : i32
    %c0_i32_0 = arith.constant 0 : i32
    return %arg0, %c0_i32 : i32, i32
  }
  func.func @transform_1(%arg0: i32) -> (i32, i32) {
    %c0_i32 = arith.constant 0 : i32
    %c0_i32_0 = arith.constant 0 : i32
    %c0_i32_1 = arith.constant 0 : i32
    return %c0_i32, %c0_i32_0 : i32, i32
  }
  func.func @transform_2(%arg0: i32) -> (i32, i32) {
    %c0_i32 = arith.constant 0 : i32
    %c0_i32_0 = arith.constant 0 : i32
    %c0_i32_1 = arith.constant 0 : i32
    return %c0_i32, %c0_i32_0 : i32, i32
  }
  func.func @transform_3(%arg0: i32) -> (i32, i32) {
    %c0_i32 = arith.constant 0 : i32
    %c0_i32_0 = arith.constant 0 : i32
    %c0_i32_1 = arith.constant 0 : i32
    return %c0_i32, %c0_i32_0 : i32, i32
  }
  func.func @transform_4(%arg0: i32) -> (i32, i32) {
    %c0_i32 = arith.constant 0 : i32
    %c0_i32_0 = arith.constant 0 : i32
    %c0_i32_1 = arith.constant 0 : i32
    return %c0_i32, %c0_i32_0 : i32, i32
  }
  func.func @transform_5(%arg0: i32) -> (i32, i32) {
    %c0_i32 = arith.constant 0 : i32
    %c0_i32_0 = arith.constant 0 : i32
    %c0_i32_1 = arith.constant 0 : i32
    return %c0_i32, %c0_i32_0 : i32, i32
  }
  func.func @transform_6(%arg0: i32) -> (i32, i32) {
    %c0_i32 = arith.constant 0 : i32
    %c0_i32_0 = arith.constant 0 : i32
    %c0_i32_1 = arith.constant 0 : i32
    return %c0_i32, %c0_i32_0 : i32, i32
  }
  func.func @transform_7(%arg0: i32) -> (i32, i32) {
    %c0_i32 = arith.constant 0 : i32
    %c0_i32_0 = arith.constant 0 : i32
    %c0_i32_1 = arith.constant 0 : i32
    return %c0_i32, %c0_i32_0 : i32, i32
  }
  func.func @transform_8(%arg0: i32) -> (i32, i32) {
    %c0_i32 = arith.constant 0 : i32
    %c0_i32_0 = arith.constant 0 : i32
    %c0_i32_1 = arith.constant 0 : i32
    return %c0_i32, %c0_i32_0 : i32, i32
  }
  func.func @transform_9(%arg0: i32) -> (i32, i32) {
    %c0_i32 = arith.constant 0 : i32
    %c0_i32_0 = arith.constant 0 : i32
    %c0_i32_1 = arith.constant 0 : i32
    return %c0_i32, %c0_i32_0 : i32, i32
  }
  func.func @transform_10(%arg0: i32) -> (i32, i32) {
    %c0_i32 = arith.constant 0 : i32
    %c0_i32_0 = arith.constant 0 : i32
    %c0_i32_1 = arith.constant 0 : i32
    return %c0_i32, %c0_i32_0 : i32, i32
  }
  func.func @transform_11(%arg0: i32) -> (i32, i32) {
    %c0_i32 = arith.constant 0 : i32
    %c0_i32_0 = arith.constant 0 : i32
    %c0_i32_1 = arith.constant 0 : i32
    return %c0_i32, %c0_i32_0 : i32, i32
  }
  func.func @transform_12(%arg0: i32) -> (i32, i32) {
    %c0_i32 = arith.constant 0 : i32
    %c0_i32_0 = arith.constant 0 : i32
    return %arg0, %c0_i32 : i32, i32
  }
}

</mosaic_0001>

<llo_original>
// kernel: actor_forward.1
$region0: #{actor_forward.1}
  #allocation0 [shape = 'u32[]', space=smem, size = 0x4, offset = 0x4, fixed_abs, tag = 'smem constant byte address 0x4 - core index']
  #allocation1 [shape = 'u32[144,128]{1,0:T(1,128)}', space=vmem, size = 0x12000, scoped, tag = 'internal scratch']
  %s0 = inlined_call_operand.vmem [shape: f32[8,128], index: 0, kind: input, shape index: {}]
  %s1 = inlined_call_operand.hbm [shape: s8[128,512], index: 1, kind: input, shape index: {}]
  %s2 = inlined_call_operand.vmem [shape: f32[1,512], index: 2, kind: input, shape index: {}]
  %s3 = inlined_call_operand.vmem [shape: f32[1,512], index: 3, kind: input, shape index: {}]
  %s4 = inlined_call_operand.hbm [shape: s8[512,512], index: 4, kind: input, shape index: {}]
  %s5 = inlined_call_operand.vmem [shape: f32[1,512], index: 5, kind: input, shape index: {}]
  %s6 = inlined_call_operand.vmem [shape: f32[1,512], index: 6, kind: input, shape index: {}]
  %s7 = inlined_call_operand.hbm [shape: s8[512,512], index: 7, kind: input, shape index: {}]
  %s8 = inlined_call_operand.vmem [shape: f32[1,512], index: 8, kind: input, shape index: {}]
  %s9 = inlined_call_operand.vmem [shape: f32[1,512], index: 9, kind: input, shape index: {}]
  %s10 = inlined_call_operand.hbm [shape: bf16[512,128], index: 10, kind: input, shape index: {}]
  %s11 = inlined_call_operand.vmem [shape: f32[1,128], index: 11, kind: input, shape index: {}]
  %s12 = inlined_call_operand.vmem [shape: f32[8,128], index: 12, kind: output, shape index: {}]
  %s13 = sld [smem:[#allocation0]]
  $region74: #{actor_forward.1} parent=0
    _
  %s15 = ssub.s32 1, %s13
  %s16 = scalar_select 0, %s15, %s13
  $region1: #{actor_forward.1} parent=0
    #allocation2 [shape = 'u8[65536]{0}', space=vmem, size = 0x10000, scoped, tag = 'input window, operand 1, single buffered']
    #allocation3 [shape = 's32[1]{0}', space=sflag, size = 0x4, scoped, tag = 'scoped memory for actor_forward.1']
    #allocation4 [shape = 'u8[262144]{0}', space=vmem, size = 0x40000, scoped, tag = 'input window, operand 4, single buffered']
    #allocation5 [shape = 's32[1]{0}', space=sflag, size = 0x4, scoped, tag = 'scoped memory for actor_forward.1']
    #allocation6 [shape = 'u8[262144]{0}', space=vmem, size = 0x40000, scoped, tag = 'input window, operand 7, single buffered']
    #allocation7 [shape = 'u8[131072]{0}', space=vmem, size = 0x20000, scoped, tag = 'input window, operand 10, single buffered']
    #allocation8 [shape = 's32[1]{0}', space=sflag, size = 0x4, scoped, tag = 'scoped memory for actor_forward.1']
    %17 = vsyncpa [#allocation3], 0
    %18 = vsyncpa [#allocation5], 0
    %19 = vsyncpa [#allocation8], 0
    // Predicated region
    $region2: #{actor_forward.1} parent=1 // pred_check
      _
    $region3: #{actor_forward.1} parent=1 // pred_check_branch
      %21 = sbr.rel (0) target = $region5
    $region4: #{actor_forward.1} parent=1 // pred_region
      _
    $region5: #{actor_forward.1} parent=1 // pred_fallthru
      _
    // Predicated region
    $region6: #{actor_forward.1} parent=1 // pred_check
      _
    $region7: #{actor_forward.1} parent=1 // pred_check_branch
      %23 = sbr.rel (0) target = $region9
    $region8: #{actor_forward.1} parent=1 // pred_region
      %s25 = ssub.s32 2048, 2048
      %26 = vsyncadd [#allocation3], %s25
      %s27 = sshll.u32 [#allocation2], 4
      %s28 = int_to_ptr.vmem [resolvable:$true] %s27
      %33 = dma.hbm_to_vmem [thread:$0]  %s1, 2048, %s28, [#allocation3], 512, 512, 32
    $region9: #{actor_forward.1} parent=1 // pred_fallthru
      _
    // Predicated region
    $region10: #{actor_forward.1} parent=1 // pred_check
      _
    $region11: #{actor_forward.1} parent=1 // pred_check_branch
      %35 = sbr.rel (0) target = $region13
    $region12: #{actor_forward.1} parent=1 // pred_region
      _
    $region13: #{actor_forward.1} parent=1 // pred_fallthru
      _
    // Predicated region
    $region14: #{actor_forward.1} parent=1 // pred_check
      _
    $region15: #{actor_forward.1} parent=1 // pred_check_branch
      %37 = sbr.rel (0) target = $region17
    $region16: #{actor_forward.1} parent=1 // pred_region
      _
    $region17: #{actor_forward.1} parent=1 // pred_fallthru
      _
    // Predicated region
    $region18: #{actor_forward.1} parent=1 // pred_check
      _
    $region19: #{actor_forward.1} parent=1 // pred_check_branch
      %39 = sbr.rel (0) target = $region21
    $region20: #{actor_forward.1} parent=1 // pred_region
      %s41 = ssub.s32 8192, 8192
      %42 = vsyncadd [#allocation5], %s41
      %s43 = sshll.u32 [#allocation4], 4
      %s44 = int_to_ptr.vmem [resolvable:$true] %s43
      %49 = dma.hbm_to_vmem [thread:$0]  %s4, 8192, %s44, [#allocation5], 512, 512, 32
    $region21: #{actor_forward.1} parent=1 // pred_fallthru
      _
    // Predicated region
    $region22: #{actor_forward.1} parent=1 // pred_check
      _
    $region23: #{actor_forward.1} parent=1 // pred_check_branch
      %51 = sbr.rel (0) target = $region25
    $region24: #{actor_forward.1} parent=1 // pred_region
      _
    $region25: #{actor_forward.1} parent=1 // pred_fallthru
      _
    // Predicated region
    $region26: #{actor_forward.1} parent=1 // pred_check
      _
    $region27: #{actor_forward.1} parent=1 // pred_check_branch
      %53 = sbr.rel (0) target = $region29
    $region28: #{actor_forward.1} parent=1 // pred_region
      _
    $region29: #{actor_forward.1} parent=1 // pred_fallthru
      _
    // Predicated region
    $region30: #{actor_forward.1} parent=1 // pred_check
      _
    $region31: #{actor_forward.1} parent=1 // pred_check_branch
      %55 = sbr.rel (0) target = $region33
    $region32: #{actor_forward.1} parent=1 // pred_region
      %s57 = ssub.s32 8192, 8192
      %58 = vsyncadd [#allocation5], %s57
      %s59 = sshll.u32 [#allocation6], 4
      %s60 = int_to_ptr.vmem [resolvable:$true] %s59
      %65 = dma.hbm_to_vmem [thread:$0]  %s7, 8192, %s60, [#allocation5], 512, 512, 32
    $region33: #{actor_forward.1} parent=1 // pred_fallthru
      _
    // Predicated region
    $region34: #{actor_forward.1} parent=1 // pred_check
      _
    $region35: #{actor_forward.1} parent=1 // pred_check_branch
      %67 = sbr.rel (0) target = $region37
    $region36: #{actor_forward.1} parent=1 // pred_region
      _
    $region37: #{actor_forward.1} parent=1 // pred_fallthru
      _
    // Predicated region
    $region38: #{actor_forward.1} parent=1 // pred_check
      _
    $region39: #{actor_forward.1} parent=1 // pred_check_branch
      %69 = sbr.rel (0) target = $region41
    $region40: #{actor_forward.1} parent=1 // pred_region
      _
    $region41: #{actor_forward.1} parent=1 // pred_fallthru
      _
    // Predicated region
    $region42: #{actor_forward.1} parent=1 // pred_check
      _
    $region43: #{actor_forward.1} parent=1 // pred_check_branch
      %71 = sbr.rel (0) target = $region45
    $region44: #{actor_forward.1} parent=1 // pred_region
      %s73 = ssub.s32 4096, 4096
      %74 = vsyncadd [#allocation8], %s73
      %s75 = sshll.u32 [#allocation7], 4
      %s76 = int_to_ptr.vmem [resolvable:$true] %s75
      %81 = dma.hbm_to_vmem [thread:$0]  %s10, 4096, %s76, [#allocation8], 64, 64, 4
    $region45: #{actor_forward.1} parent=1 // pred_fallthru
      _
    // Predicated region
    $region46: #{actor_forward.1} parent=1 // pred_check
      _
    $region47: #{actor_forward.1} parent=1 // pred_check_branch
      %83 = sbr.rel (0) target = $region49
    $region48: #{actor_forward.1} parent=1 // pred_region
      _
    $region49: #{actor_forward.1} parent=1 // pred_fallthru
      _
    // Predicated region
    $region50: #{actor_forward.1} parent=1 // pred_check
      _
    $region51: #{actor_forward.1} parent=1 // pred_check_branch
      %85 = sbr.rel (0) target = $region53
    $region52: #{actor_forward.1} parent=1 // pred_region
      %86 = dma.done [#allocation3], 2048
    $region53: #{actor_forward.1} parent=1 // pred_fallthru
      _
    // Predicated region
    $region54: #{actor_forward.1} parent=1 // pred_check
      _
    $region55: #{actor_forward.1} parent=1 // pred_check_branch
      %88 = sbr.rel (0) target = $region57
    $region56: #{actor_forward.1} parent=1 // pred_region
      %89 = dma.done [#allocation5], 8192
    $region57: #{actor_forward.1} parent=1 // pred_fallthru
      _
    // Predicated region
    $region58: #{actor_forward.1} parent=1 // pred_check
      _
    $region59: #{actor_forward.1} parent=1 // pred_check_branch
      %91 = sbr.rel (0) target = $region61
    $region60: #{actor_forward.1} parent=1 // pred_region
      %92 = dma.done [#allocation5], 8192
    $region61: #{actor_forward.1} parent=1 // pred_fallthru
      _
    // Predicated region
    $region62: #{actor_forward.1} parent=1 // pred_check
      _
    $region63: #{actor_forward.1} parent=1 // pred_check_branch
      %94 = sbr.rel (0) target = $region65
    $region64: #{actor_forward.1} parent=1 // pred_region
      %95 = dma.done [#allocation8], 4096
    $region65: #{actor_forward.1} parent=1 // pred_fallthru
      _
    %v97 = vld [vmem:[%s0] sm:$0xff]
    %v98 = vpack.c.bf16 %v97, %v97
    %v99 = vld [vmem:[#allocation2] sm:$0xff]
    %v100 = vld [vmem:[#allocation2 + $0x8] sm:$0xff]
    %v101 = vld [vmem:[#allocation2 + $0x10] sm:$0xff]
    %v102 = vld [vmem:[#allocation2 + $0x18] sm:$0xff]
    %v103 = vld [vmem:[#allocation2 + $0x20] sm:$0xff]
    %v104 = vld [vmem:[#allocation2 + $0x28] sm:$0xff]
    %v105 = vld [vmem:[#allocation2 + $0x30] sm:$0xff]
    %v106 = vld [vmem:[#allocation2 + $0x38] sm:$0xff]
    %v107 = vld [vmem:[#allocation2 + $0x40] sm:$0xff]
    %v108 = vld [vmem:[#allocation2 + $0x48] sm:$0xff]
    %v109 = vld [vmem:[#allocation2 + $0x50] sm:$0xff]
    %v110 = vld [vmem:[#allocation2 + $0x58] sm:$0xff]
    %v111 = vld [vmem:[#allocation2 + $0x60] sm:$0xff]
    %v112 = vld [vmem:[#allocation2 + $0x68] sm:$0xff]
    %v113 = vld [vmem:[#allocation2 + $0x70] sm:$0xff]
    %v114 = vld [vmem:[#allocation2 + $0x78] sm:$0xff]
    %v115 = vunpack.c.l.s8.bf16 %v99
    %v116 = vunpack.c.l.s8.bf16 %v100
    %v117 = vunpack.c.l.s8.bf16 %v101
    %v118 = vunpack.c.l.s8.bf16 %v102
    %v119 = vunpack.c.h.s8.bf16 %v99
    %v120 = vunpack.c.h.s8.bf16 %v100
    %v121 = vunpack.c.h.s8.bf16 %v101
    %v122 = vunpack.c.h.s8.bf16 %v102
    %v123 = vunpack.c.l.s8.bf16 %v103
    %v124 = vunpack.c.l.s8.bf16 %v104
    %v125 = vunpack.c.l.s8.bf16 %v105
    %v126 = vunpack.c.l.s8.bf16 %v106
    %v127 = vunpack.c.h.s8.bf16 %v103
    %v128 = vunpack.c.h.s8.bf16 %v104
    %v129 = vunpack.c.h.s8.bf16 %v105
    %v130 = vunpack.c.h.s8.bf16 %v106
    %v131 = vunpack.c.l.s8.bf16 %v107
    %v132 = vunpack.c.l.s8.bf16 %v108
    %v133 = vunpack.c.l.s8.bf16 %v109
    %v134 = vunpack.c.l.s8.bf16 %v110
    %v135 = vunpack.c.h.s8.bf16 %v107
    %v136 = vunpack.c.h.s8.bf16 %v108
    %v137 = vunpack.c.h.s8.bf16 %v109
    %v138 = vunpack.c.h.s8.bf16 %v110
    %v139 = vunpack.c.l.s8.bf16 %v111
    %v140 = vunpack.c.l.s8.bf16 %v112
    %v141 = vunpack.c.l.s8.bf16 %v113
    %v142 = vunpack.c.l.s8.bf16 %v114
    %v143 = vunpack.c.h.s8.bf16 %v111
    %v144 = vunpack.c.h.s8.bf16 %v112
    %v145 = vunpack.c.h.s8.bf16 %v113
    %v146 = vunpack.c.h.s8.bf16 %v114
    %147 = vmatprep.subr.bf16.mxu0 %v116
    %148 = vmatpush1.bf16.msra.mxu0 %v115
    %149 = vmatprep.subr.bf16.mxu0 %v120
    %150 = vmatpush1.bf16.msra.mxu0 %v119
    %151 = vmatprep.subr.bf16.mxu0 %v124
    %152 = vmatpush1.bf16.msra.mxu0 %v123
    %153 = vmatprep.subr.bf16.mxu0 %v128
    %154 = vmatpush1.bf16.msra.mxu0 %v127
    %155 = vmatprep.subr.bf16.mxu0 %v132
    %156 = vmatpush1.bf16.msra.mxu0 %v131
    %157 = vmatprep.subr.bf16.mxu0 %v136
    %158 = vmatpush1.bf16.msra.mxu0 %v135
    %159 = vmatprep.subr.bf16.mxu0 %v140
    %160 = vmatpush1.bf16.msra.mxu0 %v139
    %161 = vmatprep.subr.bf16.mxu0 %v144
    %162 = vmatpush1.bf16.msra.mxu0 %v143
    %163 = vmatprep.subr.bf16.mxu0 0
    %164 = vmatpush1.bf16.msra.mxu0 0
    %165 = vmatprep.subr.bf16.mxu0 0
    %166 = vmatpush1.bf16.msra.mxu0 0
    %167 = vmatprep.subr.bf16.mxu0 0
    %168 = vmatpush1.bf16.msra.mxu0 0
    %169 = vmatprep.subr.bf16.mxu0 0
    %170 = vmatpush1.bf16.msra.mxu0 0
    %171 = vmatprep.subr.bf16.mxu0 0
    %172 = vmatpush1.bf16.msra.mxu0 0
    %173 = vmatprep.subr.bf16.mxu0 0
    %174 = vmatpush1.bf16.msra.mxu0 0
    %175 = vmatprep.subr.bf16.mxu0 0
    %176 = vmatpush1.bf16.msra.mxu0 0
    %177 = vmatprep.subr.bf16.mxu0 0
    %178 = vmatpush1.bf16.msra.mxu0 0
    %179 = vmatprep.mubr.bf16.mxu0 0
    %180 = vmatmul.mubr.bf16.gmra.mrb[0].mxu0 %v98
    %v181 = vpop.f32.mrb[0].mxu0
    %v182 = vadd.f32 0.0, %v181
    %v183 = vpop.f32.mrb[0].mxu0
    %v184 = vadd.f32 0.0, %v183
    %v185 = vpop.f32.mrb[0].mxu0
    %v186 = vpop.f32.mrb[0].mxu0
    %187 = vdwg.mxu0
    %188 = vmatprep.subr.bf16.mxu0 %v118
    %189 = vmatpush1.bf16.msra.mxu0 %v117
    %190 = vmatprep.subr.bf16.mxu0 %v122
    %191 = vmatpush1.bf16.msra.mxu0 %v121
    %192 = vmatprep.subr.bf16.mxu0 %v126
    %193 = vmatpush1.bf16.msra.mxu0 %v125
    %194 = vmatprep.subr.bf16.mxu0 %v130
    %195 = vmatpush1.bf16.msra.mxu0 %v129
    %196 = vmatprep.subr.bf16.mxu0 %v134
    %197 = vmatpush1.bf16.msra.mxu0 %v133
    %198 = vmatprep.subr.bf16.mxu0 %v138
    %199 = vmatpush1.bf16.msra.mxu0 %v137
    %200 = vmatprep.subr.bf16.mxu0 %v142
    %201 = vmatpush1.bf16.msra.mxu0 %v141
    %202 = vmatprep.subr.bf16.mxu0 %v146
    %203 = vmatpush1.bf16.msra.mxu0 %v145
    %204 = vmatprep.subr.bf16.mxu0 0
    %205 = vmatpush1.bf16.msra.mxu0 0
    %206 = vmatprep.subr.bf16.mxu0 0
    %207 = vmatpush1.bf16.msra.mxu0 0
    %208 = vmatprep.subr.bf16.mxu0 0
    %209 = vmatpush1.bf16.msra.mxu0 0
    %210 = vmatprep.subr.bf16.mxu0 0
    %211 = vmatpush1.bf16.msra.mxu0 0
    %212 = vmatprep.subr.bf16.mxu0 0
    %213 = vmatpush1.bf16.msra.mxu0 0
    %214 = vmatprep.subr.bf16.mxu0 0
    %215 = vmatpush1.bf16.msra.mxu0 0
    %216 = vmatprep.subr.bf16.mxu0 0
    %217 = vmatpush1.bf16.msra.mxu0 0
    %218 = vmatprep.subr.bf16.mxu0 0
    %219 = vmatpush1.bf16.msra.mxu0 0
    %220 = vmatprep.mubr.bf16.mxu0 0
    %221 = vmatmul.mubr.bf16.gmra.mrb[0].mxu0 %v98
    %v222 = vpop.f32.mrb[0].mxu0
    %v223 = vadd.f32 0.0, %v222
    %v224 = vpop.f32.mrb[0].mxu0
    %v225 = vadd.f32 0.0, %v224
    %v226 = vpop.f32.mrb[0].mxu0
    %v227 = vpop.f32.mrb[0].mxu0
    %228 = vdwg.mxu0
    %v229 = vld [vmem:[%s2] sm:$0xf]
    %v231 = vlaneseq
    %v232 = vshrl.u32 %v231, 7
    %v233 = vsub.s32 0, %v232
    %v234 = vrot.slane %v229, %v233
    %v235 = vlaneseq
    %v236 = vshrl.u32 %v235, 7
    %v237 = vsub.s32 1, %v236
    %v238 = vrot.slane %v229, %v237
    %v239 = vlaneseq
    %v240 = vshrl.u32 %v239, 7
    %v241 = vsub.s32 2, %v240
    %v242 = vrot.slane %v229, %v241
    %v243 = vlaneseq
    %v244 = vshrl.u32 %v243, 7
    %v245 = vsub.s32 3, %v244
    %v246 = vrot.slane %v229, %v245
    %v251 = vmul.f32 %v182, %v234
    %v252 = vmul.f32 %v184, %v238
    %v253 = vmul.f32 %v223, %v242
    %v254 = vmul.f32 %v225, %v246
    %v255 = vld [vmem:[%s3] sm:$0xf]
    %v257 = vlaneseq
    %v258 = vshrl.u32 %v257, 7
    %v259 = vsub.s32 0, %v258
    %v260 = vrot.slane %v255, %v259
    %v261 = vlaneseq
    %v262 = vshrl.u32 %v261, 7
    %v263 = vsub.s32 1, %v262
    %v264 = vrot.slane %v255, %v263
    %v265 = vlaneseq
    %v266 = vshrl.u32 %v265, 7
    %v267 = vsub.s32 2, %v266
    %v268 = vrot.slane %v255, %v267
    %v269 = vlaneseq
    %v270 = vshrl.u32 %v269, 7
    %v271 = vsub.s32 3, %v270
    %v272 = vrot.slane %v255, %v271
    %v277 = vadd.f32 %v251, %v260
    %v278 = vadd.f32 %v252, %v264
    %v279 = vadd.f32 %v253, %v268
    %v280 = vadd.f32 %v254, %v272
    %v281 = vmul.f32 %v277, 0.01
    %v282 = vmul.f32 %v278, 0.01
    %v283 = vmul.f32 %v279, 0.01
    %v284 = vmul.f32 %v280, 0.01
    %v285 = vmax.f32 %v277, %v281
    %v286 = vmax.f32 %v278, %v282
    %v287 = vmax.f32 %v279, %v283
    %v288 = vmax.f32 %v280, %v284
    %v289 = vld [vmem:[#allocation4] sm:$0xff]
    %v290 = vld [vmem:[#allocation4 + $0x8] sm:$0xff]
    %v291 = vld [vmem:[#allocation4 + $0x10] sm:$0xff]
    %v292 = vld [vmem:[#allocation4 + $0x18] sm:$0xff]
    %v293 = vld [vmem:[#allocation4 + $0x20] sm:$0xff]
    %v294 = vld [vmem:[#allocation4 + $0x28] sm:$0xff]
    %v295 = vld [vmem:[#allocation4 + $0x30] sm:$0xff]
    %v296 = vld [vmem:[#allocation4 + $0x38] sm:$0xff]
    %v297 = vld [vmem:[#allocation4 + $0x40] sm:$0xff]
    %v298 = vld [vmem:[#allocation4 + $0x48] sm:$0xff]
    %v299 = vld [vmem:[#allocation4 + $0x50] sm:$0xff]
    %v300 = vld [vmem:[#allocation4 + $0x58] sm:$0xff]
    %v301 = vld [vmem:[#allocation4 + $0x60] sm:$0xff]
    %v302 = vld [vmem:[#allocation4 + $0x68] sm:$0xff]
    %v303 = vld [vmem:[#allocation4 + $0x70] sm:$0xff]
    %v304 = vld [vmem:[#allocation4 + $0x78] sm:$0xff]
    %v305 = vld [vmem:[#allocation4 + $0x80] sm:$0xff]
    %v306 = vld [vmem:[#allocation4 + $0x88] sm:$0xff]
    %v307 = vld [vmem:[#allocation4 + $0x90] sm:$0xff]
    %v308 = vld [vmem:[#allocation4 + $0x98] sm:$0xff]
    %v309 = vld [vmem:[#allocation4 + $0xa0] sm:$0xff]
    %v310 = vld [vmem:[#allocation4 + $0xa8] sm:$0xff]
    %v311 = vld [vmem:[#allocation4 + $0xb0] sm:$0xff]
    %v312 = vld [vmem:[#allocation4 + $0xb8] sm:$0xff]
    %v313 = vld [vmem:[#allocation4 + $0xc0] sm:$0xff]
    %v314 = vld [vmem:[#allocation4 + $0xc8] sm:$0xff]
    %v315 = vld [vmem:[#allocation4 + $0xd0] sm:$0xff]
    %v316 = vld [vmem:[#allocation4 + $0xd8] sm:$0xff]
    %v317 = vld [vmem:[#allocation4 + $0xe0] sm:$0xff]
    %v318 = vld [vmem:[#allocation4 + $0xe8] sm:$0xff]
    %v319 = vld [vmem:[#allocation4 + $0xf0] sm:$0xff]
    %v320 = vld [vmem:[#allocation4 + $0xf8] sm:$0xff]
    %v321 = vld [vmem:[#allocation4 + $0x100] sm:$0xff]
    %v322 = vld [vmem:[#allocation4 + $0x108] sm:$0xff]
    %v323 = vld [vmem:[#allocation4 + $0x110] sm:$0xff]
    %v324 = vld [vmem:[#allocation4 + $0x118] sm:$0xff]
    %v325 = vld [vmem:[#allocation4 + $0x120] sm:$0xff]
    %v326 = vld [vmem:[#allocation4 + $0x128] sm:$0xff]
    %v327 = vld [vmem:[#allocation4 + $0x130] sm:$0xff]
    %v328 = vld [vmem:[#allocation4 + $0x138] sm:$0xff]
    %v329 = vld [vmem:[#allocation4 + $0x140] sm:$0xff]
    %v330 = vld [vmem:[#allocation4 + $0x148] sm:$0xff]
    %v331 = vld [vmem:[#allocation4 + $0x150] sm:$0xff]
    %v332 = vld [vmem:[#allocation4 + $0x158] sm:$0xff]
    %v333 = vld [vmem:[#allocation4 + $0x160] sm:$0xff]
    %v334 = vld [vmem:[#allocation4 + $0x168] sm:$0xff]
    %v335 = vld [vmem:[#allocation4 + $0x170] sm:$0xff]
    %v336 = vld [vmem:[#allocation4 + $0x178] sm:$0xff]
    %v337 = vld [vmem:[#allocation4 + $0x180] sm:$0xff]
    %v338 = vld [vmem:[#allocation4 + $0x188] sm:$0xff]
    %v339 = vld [vmem:[#allocation4 + $0x190] sm:$0xff]
    %v340 = vld [vmem:[#allocation4 + $0x198] sm:$0xff]
    %v341 = vld [vmem:[#allocation4 + $0x1a0] sm:$0xff]
    %v342 = vld [vmem:[#allocation4 + $0x1a8] sm:$0xff]
    %v343 = vld [vmem:[#allocation4 + $0x1b0] sm:$0xff]
    %v344 = vld [vmem:[#allocation4 + $0x1b8] sm:$0xff]
    %v345 = vld [vmem:[#allocation4 + $0x1c0] sm:$0xff]
    %v346 = vld [vmem:[#allocation4 + $0x1c8] sm:$0xff]
    %v347 = vld [vmem:[#allocation4 + $0x1d0] sm:$0xff]
    %v348 = vld [vmem:[#allocation4 + $0x1d8] sm:$0xff]
    %v349 = vld [vmem:[#allocation4 + $0x1e0] sm:$0xff]
    %v350 = vld [vmem:[#allocation4 + $0x1e8] sm:$0xff]
    %v351 = vld [vmem:[#allocation4 + $0x1f0] sm:$0xff]
    %v352 = vld [vmem:[#allocation4 + $0x1f8] sm:$0xff]
    %v353 = vunpack.c.l.s8.bf16 %v289
    %v354 = vunpack.c.l.s8.bf16 %v290
    %v355 = vunpack.c.l.s8.bf16 %v291
    %v356 = vunpack.c.l.s8.bf16 %v292
    %v357 = vunpack.c.h.s8.bf16 %v289
    %v358 = vunpack.c.h.s8.bf16 %v290
    %v359 = vunpack.c.h.s8.bf16 %v291
    %v360 = vunpack.c.h.s8.bf16 %v292
    %v361 = vunpack.c.l.s8.bf16 %v293
    %v362 = vunpack.c.l.s8.bf16 %v294
    %v363 = vunpack.c.l.s8.bf16 %v295
    %v364 = vunpack.c.l.s8.bf16 %v296
    %v365 = vunpack.c.h.s8.bf16 %v293
    %v366 = vunpack.c.h.s8.bf16 %v294
    %v367 = vunpack.c.h.s8.bf16 %v295
    %v368 = vunpack.c.h.s8.bf16 %v296
    %v369 = vunpack.c.l.s8.bf16 %v297
    %v370 = vunpack.c.l.s8.bf16 %v298
    %v371 = vunpack.c.l.s8.bf16 %v299
    %v372 = vunpack.c.l.s8.bf16 %v300
    %v373 = vunpack.c.h.s8.bf16 %v297
    %v374 = vunpack.c.h.s8.bf16 %v298
    %v375 = vunpack.c.h.s8.bf16 %v299
    %v376 = vunpack.c.h.s8.bf16 %v300
    %v377 = vunpack.c.l.s8.bf16 %v301
    %v378 = vunpack.c.l.s8.bf16 %v302
    %v379 = vunpack.c.l.s8.bf16 %v303
    %v380 = vunpack.c.l.s8.bf16 %v304
    %v381 = vunpack.c.h.s8.bf16 %v301
    %v382 = vunpack.c.h.s8.bf16 %v302
    %v383 = vunpack.c.h.s8.bf16 %v303
    %v384 = vunpack.c.h.s8.bf16 %v304
    %v385 = vunpack.c.l.s8.bf16 %v305
    %v386 = vunpack.c.l.s8.bf16 %v306
    %v387 = vunpack.c.l.s8.bf16 %v307
    %v388 = vunpack.c.l.s8.bf16 %v308
    %v389 = vunpack.c.h.s8.bf16 %v305
    %v390 = vunpack.c.h.s8.bf16 %v306
    %v391 = vunpack.c.h.s8.bf16 %v307
    %v392 = vunpack.c.h.s8.bf16 %v308
    %v393 = vunpack.c.l.s8.bf16 %v309
    %v394 = vunpack.c.l.s8.bf16 %v310
    %v395 = vunpack.c.l.s8.bf16 %v311
    %v396 = vunpack.c.l.s8.bf16 %v312
    %v397 = vunpack.c.h.s8.bf16 %v309
    %v398 = vunpack.c.h.s8.bf16 %v310
    %v399 = vunpack.c.h.s8.bf16 %v311
    %v400 = vunpack.c.h.s8.bf16 %v312
    %v401 = vunpack.c.l.s8.bf16 %v313
    %v402 = vunpack.c.l.s8.bf16 %v314
    %v403 = vunpack.c.l.s8.bf16 %v315
    %v404 = vunpack.c.l.s8.bf16 %v316
    %v405 = vunpack.c.h.s8.bf16 %v313
    %v406 = vunpack.c.h.s8.bf16 %v314
    %v407 = vunpack.c.h.s8.bf16 %v315
    %v408 = vunpack.c.h.s8.bf16 %v316
    %v409 = vunpack.c.l.s8.bf16 %v317
    %v410 = vunpack.c.l.s8.bf16 %v318
    %v411 = vunpack.c.l.s8.bf16 %v319
    %v412 = vunpack.c.l.s8.bf16 %v320
    %v413 = vunpack.c.h.s8.bf16 %v317
    %v414 = vunpack.c.h.s8.bf16 %v318
    %v415 = vunpack.c.h.s8.bf16 %v319
    %v416 = vunpack.c.h.s8.bf16 %v320
    %v417 = vunpack.c.l.s8.bf16 %v321
    %v418 = vunpack.c.l.s8.bf16 %v322
    %v419 = vunpack.c.l.s8.bf16 %v323
    %v420 = vunpack.c.l.s8.bf16 %v324
    %v421 = vunpack.c.h.s8.bf16 %v321
    %v422 = vunpack.c.h.s8.bf16 %v322
    %v423 = vunpack.c.h.s8.bf16 %v323
    %v424 = vunpack.c.h.s8.bf16 %v324
    %v425 = vunpack.c.l.s8.bf16 %v325
    %v426 = vunpack.c.l.s8.bf16 %v326
    %v427 = vunpack.c.l.s8.bf16 %v327
    %v428 = vunpack.c.l.s8.bf16 %v328
    %v429 = vunpack.c.h.s8.bf16 %v325
    %v430 = vunpack.c.h.s8.bf16 %v326
    %v431 = vunpack.c.h.s8.bf16 %v327
    %v432 = vunpack.c.h.s8.bf16 %v328
    %v433 = vunpack.c.l.s8.bf16 %v329
    %v434 = vunpack.c.l.s8.bf16 %v330
    %v435 = vunpack.c.l.s8.bf16 %v331
    %v436 = vunpack.c.l.s8.bf16 %v332
    %v437 = vunpack.c.h.s8.bf16 %v329
    %v438 = vunpack.c.h.s8.bf16 %v330
    %v439 = vunpack.c.h.s8.bf16 %v331
    %v440 = vunpack.c.h.s8.bf16 %v332
    %v441 = vunpack.c.l.s8.bf16 %v333
    %v442 = vunpack.c.l.s8.bf16 %v334
    %v443 = vunpack.c.l.s8.bf16 %v335
    %v444 = vunpack.c.l.s8.bf16 %v336
    %v445 = vunpack.c.h.s8.bf16 %v333
    %v446 = vunpack.c.h.s8.bf16 %v334
    %v447 = vunpack.c.h.s8.bf16 %v335
    %v448 = vunpack.c.h.s8.bf16 %v336
    %v449 = vunpack.c.l.s8.bf16 %v337
    %v450 = vunpack.c.l.s8.bf16 %v338
    %v451 = vunpack.c.l.s8.bf16 %v339
    %v452 = vunpack.c.l.s8.bf16 %v340
    %v453 = vunpack.c.h.s8.bf16 %v337
    %v454 = vunpack.c.h.s8.bf16 %v338
    %v455 = vunpack.c.h.s8.bf16 %v339
    %v456 = vunpack.c.h.s8.bf16 %v340
    %v457 = vunpack.c.l.s8.bf16 %v341
    %v458 = vunpack.c.l.s8.bf16 %v342
    %v459 = vunpack.c.l.s8.bf16 %v343
    %v460 = vunpack.c.l.s8.bf16 %v344
    %v461 = vunpack.c.h.s8.bf16 %v341
    %v462 = vunpack.c.h.s8.bf16 %v342
    %v463 = vunpack.c.h.s8.bf16 %v343
    %v464 = vunpack.c.h.s8.bf16 %v344
    %v465 = vunpack.c.l.s8.bf16 %v345
    %v466 = vunpack.c.l.s8.bf16 %v346
    %v467 = vunpack.c.l.s8.bf16 %v347
    %v468 = vunpack.c.l.s8.bf16 %v348
    %v469 = vunpack.c.h.s8.bf16 %v345
    %v470 = vunpack.c.h.s8.bf16 %v346
    %v471 = vunpack.c.h.s8.bf16 %v347
    %v472 = vunpack.c.h.s8.bf16 %v348
    %v473 = vunpack.c.l.s8.bf16 %v349
    %v474 = vunpack.c.l.s8.bf16 %v350
    %v475 = vunpack.c.l.s8.bf16 %v351
    %v476 = vunpack.c.l.s8.bf16 %v352
    %v477 = vunpack.c.h.s8.bf16 %v349
    %v478 = vunpack.c.h.s8.bf16 %v350
    %v479 = vunpack.c.h.s8.bf16 %v351
    %v480 = vunpack.c.h.s8.bf16 %v352
    %v481 = vpack.c.bf16 %v285, %v285
    %v482 = vpack.c.bf16 %v286, %v286
    %v483 = vpack.c.bf16 %v287, %v287
    %v484 = vpack.c.bf16 %v288, %v288
    %485 = vmatprep.subr.bf16.mxu0 %v354
    %486 = vmatpush1.bf16.msra.mxu0 %v353
    %487 = vmatprep.subr.bf16.mxu0 %v358
    %488 = vmatpush1.bf16.msra.mxu0 %v357
    %489 = vmatprep.subr.bf16.mxu0 %v362
    %490 = vmatpush1.bf16.msra.mxu0 %v361
    %491 = vmatprep.subr.bf16.mxu0 %v366
    %492 = vmatpush1.bf16.msra.mxu0 %v365
    %493 = vmatprep.subr.bf16.mxu0 %v370
    %494 = vmatpush1.bf16.msra.mxu0 %v369
    %495 = vmatprep.subr.bf16.mxu0 %v374
    %496 = vmatpush1.bf16.msra.mxu0 %v373
    %497 = vmatprep.subr.bf16.mxu0 %v378
    %498 = vmatpush1.bf16.msra.mxu0 %v377
    %499 = vmatprep.subr.bf16.mxu0 %v382
    %500 = vmatpush1.bf16.msra.mxu0 %v381
    %501 = vmatprep.subr.bf16.mxu0 %v386
    %502 = vmatpush1.bf16.msra.mxu0 %v385
    %503 = vmatprep.subr.bf16.mxu0 %v390
    %504 = vmatpush1.bf16.msra.mxu0 %v389
    %505 = vmatprep.subr.bf16.mxu0 %v394
    %506 = vmatpush1.bf16.msra.mxu0 %v393
    %507 = vmatprep.subr.bf16.mxu0 %v398
    %508 = vmatpush1.bf16.msra.mxu0 %v397
    %509 = vmatprep.subr.bf16.mxu0 %v402
    %510 = vmatpush1.bf16.msra.mxu0 %v401
    %511 = vmatprep.subr.bf16.mxu0 %v406
    %512 = vmatpush1.bf16.msra.mxu0 %v405
    %513 = vmatprep.subr.bf16.mxu0 %v410
    %514 = vmatpush1.bf16.msra.mxu0 %v409
    %515 = vmatprep.subr.bf16.mxu0 %v414
    %516 = vmatpush1.bf16.msra.mxu0 %v413
    %517 = vmatprep.mubr.bf16.mxu0 %v482
    %518 = vmatmul.mubr.bf16.gmra.mrb[0].mxu0 %v481
    %v519 = vpop.f32.mrb[0].mxu0
    %v520 = vadd.f32 0.0, %v519
    %v521 = vpop.f32.mrb[0].mxu0
    %v522 = vadd.f32 0.0, %v521
    %v523 = vpop.f32.mrb[0].mxu0
    %v524 = vpop.f32.mrb[0].mxu0
    %525 = vdwg.mxu0
    %526 = vmatprep.subr.bf16.mxu0 %v418
    %527 = vmatpush1.bf16.msra.mxu0 %v417
    %528 = vmatprep.subr.bf16.mxu0 %v422
    %529 = vmatpush1.bf16.msra.mxu0 %v421
    %530 = vmatprep.subr.bf16.mxu0 %v426
    %531 = vmatpush1.bf16.msra.mxu0 %v425
    %532 = vmatprep.subr.bf16.mxu0 %v430
    %533 = vmatpush1.bf16.msra.mxu0 %v429
    %534 = vmatprep.subr.bf16.mxu0 %v434
    %535 = vmatpush1.bf16.msra.mxu0 %v433
    %536 = vmatprep.subr.bf16.mxu0 %v438
    %537 = vmatpush1.bf16.msra.mxu0 %v437
    %538 = vmatprep.subr.bf16.mxu0 %v442
    %539 = vmatpush1.bf16.msra.mxu0 %v441
    %540 = vmatprep.subr.bf16.mxu0 %v446
    %541 = vmatpush1.bf16.msra.mxu0 %v445
    %542 = vmatprep.subr.bf16.mxu0 %v450
    %543 = vmatpush1.bf16.msra.mxu0 %v449
    %544 = vmatprep.subr.bf16.mxu0 %v454
    %545 = vmatpush1.bf16.msra.mxu0 %v453
    %546 = vmatprep.subr.bf16.mxu0 %v458
    %547 = vmatpush1.bf16.msra.mxu0 %v457
    %548 = vmatprep.subr.bf16.mxu0 %v462
    %549 = vmatpush1.bf16.msra.mxu0 %v461
    %550 = vmatprep.subr.bf16.mxu0 %v466
    %551 = vmatpush1.bf16.msra.mxu0 %v465
    %552 = vmatprep.subr.bf16.mxu0 %v470
    %553 = vmatpush1.bf16.msra.mxu0 %v469
    %554 = vmatprep.subr.bf16.mxu0 %v474
    %555 = vmatpush1.bf16.msra.mxu0 %v473
    %556 = vmatprep.subr.bf16.mxu0 %v478
    %557 = vmatpush1.bf16.msra.mxu0 %v477
    %558 = vmatprep.mubr.bf16.mxu0 %v484
    %559 = vmatmul.mubr.bf16.gmra.mrb[0].mxu0 %v483
    %v560 = vpop.f32.mrb[0].mxu0
    %v561 = vadd.f32 %v520, %v560
    %v562 = vpop.f32.mrb[0].mxu0
    %v563 = vadd.f32 %v522, %v562
    %v564 = vpop.f32.mrb[0].mxu0
    %v565 = vpop.f32.mrb[0].mxu0
    %566 = vdwg.mxu0
    %567 = vmatprep.subr.bf16.mxu0 %v356
    %568 = vmatpush1.bf16.msra.mxu0 %v355
    %569 = vmatprep.subr.bf16.mxu0 %v360
    %570 = vmatpush1.bf16.msra.mxu0 %v359
    %571 = vmatprep.subr.bf16.mxu0 %v364
    %572 = vmatpush1.bf16.msra.mxu0 %v363
    %573 = vmatprep.subr.bf16.mxu0 %v368
    %574 = vmatpush1.bf16.msra.mxu0 %v367
    %575 = vmatprep.subr.bf16.mxu0 %v372
    %576 = vmatpush1.bf16.msra.mxu0 %v371
    %577 = vmatprep.subr.bf16.mxu0 %v376
    %578 = vmatpush1.bf16.msra.mxu0 %v375
    %579 = vmatprep.subr.bf16.mxu0 %v380
    %580 = vmatpush1.bf16.msra.mxu0 %v379
    %581 = vmatprep.subr.bf16.mxu0 %v384
    %582 = vmatpush1.bf16.msra.mxu0 %v383
    %583 = vmatprep.subr.bf16.mxu0 %v388
    %584 = vmatpush1.bf16.msra.mxu0 %v387
    %585 = vmatprep.subr.bf16.mxu0 %v392
    %586 = vmatpush1.bf16.msra.mxu0 %v391
    %587 = vmatprep.subr.bf16.mxu0 %v396
    %588 = vmatpush1.bf16.msra.mxu0 %v395
    %589 = vmatprep.subr.bf16.mxu0 %v400
    %590 = vmatpush1.bf16.msra.mxu0 %v399
    %591 = vmatprep.subr.bf16.mxu0 %v404
    %592 = vmatpush1.bf16.msra.mxu0 %v403
    %593 = vmatprep.subr.bf16.mxu0 %v408
    %594 = vmatpush1.bf16.msra.mxu0 %v407
    %595 = vmatprep.subr.bf16.mxu0 %v412
    %596 = vmatpush1.bf16.msra.mxu0 %v411
    %597 = vmatprep.subr.bf16.mxu0 %v416
    %598 = vmatpush1.bf16.msra.mxu0 %v415
    %599 = vmatprep.mubr.bf16.mxu0 %v482
    %600 = vmatmul.mubr.bf16.gmra.mrb[0].mxu0 %v481
    %v601 = vpop.f32.mrb[0].mxu0
    %v602 = vadd.f32 0.0, %v601
    %v603 = vpop.f32.mrb[0].mxu0
    %v604 = vadd.f32 0.0, %v603
    %v605 = vpop.f32.mrb[0].mxu0
    %v606 = vpop.f32.mrb[0].mxu0
    %607 = vdwg.mxu0
    %608 = vmatprep.subr.bf16.mxu0 %v420
    %609 = vmatpush1.bf16.msra.mxu0 %v419
    %610 = vmatprep.subr.bf16.mxu0 %v424
    %611 = vmatpush1.bf16.msra.mxu0 %v423
    %612 = vmatprep.subr.bf16.mxu0 %v428
    %613 = vmatpush1.bf16.msra.mxu0 %v427
    %614 = vmatprep.subr.bf16.mxu0 %v432
    %615 = vmatpush1.bf16.msra.mxu0 %v431
    %616 = vmatprep.subr.bf16.mxu0 %v436
    %617 = vmatpush1.bf16.msra.mxu0 %v435
    %618 = vmatprep.subr.bf16.mxu0 %v440
    %619 = vmatpush1.bf16.msra.mxu0 %v439
    %620 = vmatprep.subr.bf16.mxu0 %v444
    %621 = vmatpush1.bf16.msra.mxu0 %v443
    %622 = vmatprep.subr.bf16.mxu0 %v448
    %623 = vmatpush1.bf16.msra.mxu0 %v447
    %624 = vmatprep.subr.bf16.mxu0 %v452
    %625 = vmatpush1.bf16.msra.mxu0 %v451
    %626 = vmatprep.subr.bf16.mxu0 %v456
    %627 = vmatpush1.bf16.msra.mxu0 %v455
    %628 = vmatprep.subr.bf16.mxu0 %v460
    %629 = vmatpush1.bf16.msra.mxu0 %v459
    %630 = vmatprep.subr.bf16.mxu0 %v464
    %631 = vmatpush1.bf16.msra.mxu0 %v463
    %632 = vmatprep.subr.bf16.mxu0 %v468
    %633 = vmatpush1.bf16.msra.mxu0 %v467
    %634 = vmatprep.subr.bf16.mxu0 %v472
    %635 = vmatpush1.bf16.msra.mxu0 %v471
    %636 = vmatprep.subr.bf16.mxu0 %v476
    %637 = vmatpush1.bf16.msra.mxu0 %v475
    %638 = vmatprep.subr.bf16.mxu0 %v480
    %639 = vmatpush1.bf16.msra.mxu0 %v479
    %640 = vmatprep.mubr.bf16.mxu0 %v484
    %641 = vmatmul.mubr.bf16.gmra.mrb[0].mxu0 %v483
    %v642 = vpop.f32.mrb[0].mxu0
    %v643 = vadd.f32 %v602, %v642
    %v644 = vpop.f32.mrb[0].mxu0
    %v645 = vadd.f32 %v604, %v644
    %v646 = vpop.f32.mrb[0].mxu0
    %v647 = vpop.f32.mrb[0].mxu0
    %648 = vdwg.mxu0
    %v649 = vld [vmem:[%s5] sm:$0xf]
    %v651 = vlaneseq
    %v652 = vshrl.u32 %v651, 7
    %v653 = vsub.s32 0, %v652
    %v654 = vrot.slane %v649, %v653
    %v655 = vlaneseq
    %v656 = vshrl.u32 %v655, 7
    %v657 = vsub.s32 1, %v656
    %v658 = vrot.slane %v649, %v657
    %v659 = vlaneseq
    %v660 = vshrl.u32 %v659, 7
    %v661 = vsub.s32 2, %v660
    %v662 = vrot.slane %v649, %v661
    %v663 = vlaneseq
    %v664 = vshrl.u32 %v663, 7
    %v665 = vsub.s32 3, %v664
    %v666 = vrot.slane %v649, %v665
    %v671 = vmul.f32 %v561, %v654
    %v672 = vmul.f32 %v563, %v658
    %v673 = vmul.f32 %v643, %v662
    %v674 = vmul.f32 %v645, %v666
    %v675 = vld [vmem:[%s6] sm:$0xf]
    %v677 = vlaneseq
    %v678 = vshrl.u32 %v677, 7
    %v679 = vsub.s32 0, %v678
    %v680 = vrot.slane %v675, %v679
    %v681 = vlaneseq
    %v682 = vshrl.u32 %v681, 7
    %v683 = vsub.s32 1, %v682
    %v684 = vrot.slane %v675, %v683
    %v685 = vlaneseq
    %v686 = vshrl.u32 %v685, 7
    %v687 = vsub.s32 2, %v686
    %v688 = vrot.slane %v675, %v687
    %v689 = vlaneseq
    %v690 = vshrl.u32 %v689, 7
    %v691 = vsub.s32 3, %v690
    %v692 = vrot.slane %v675, %v691
    %v697 = vadd.f32 %v671, %v680
    %v698 = vadd.f32 %v672, %v684
    %v699 = vadd.f32 %v673, %v688
    %v700 = vadd.f32 %v674, %v692
    %v701 = vmul.f32 %v697, 0.01
    %v702 = vmul.f32 %v698, 0.01
    %v703 = vmul.f32 %v699, 0.01
    %v704 = vmul.f32 %v700, 0.01
    %v705 = vmax.f32 %v697, %v701
    %v706 = vmax.f32 %v698, %v702
    %v707 = vmax.f32 %v699, %v703
    %v708 = vmax.f32 %v700, %v704
    %v709 = vld [vmem:[#allocation6] sm:$0xff]
    %v710 = vld [vmem:[#allocation6 + $0x8] sm:$0xff]
    %v711 = vld [vmem:[#allocation6 + $0x10] sm:$0xff]
    %v712 = vld [vmem:[#allocation6 + $0x18] sm:$0xff]
    %v713 = vld [vmem:[#allocation6 + $0x20] sm:$0xff]
    %v714 = vld [vmem:[#allocation6 + $0x28] sm:$0xff]
    %v715 = vld [vmem:[#allocation6 + $0x30] sm:$0xff]
    %v716 = vld [vmem:[#allocation6 + $0x38] sm:$0xff]
    %v717 = vld [vmem:[#allocation6 + $0x40] sm:$0xff]
    %v718 = vld [vmem:[#allocation6 + $0x48] sm:$0xff]
    %v719 = vld [vmem:[#allocation6 + $0x50] sm:$0xff]
    %v720 = vld [vmem:[#allocation6 + $0x58] sm:$0xff]
    %v721 = vld [vmem:[#allocation6 + $0x60] sm:$0xff]
    %v722 = vld [vmem:[#allocation6 + $0x68] sm:$0xff]
    %v723 = vld [vmem:[#allocation6 + $0x70] sm:$0xff]
    %v724 = vld [vmem:[#allocation6 + $0x78] sm:$0xff]
    %v725 = vld [vmem:[#allocation6 + $0x80] sm:$0xff]
    %v726 = vld [vmem:[#allocation6 + $0x88] sm:$0xff]
    %v727 = vld [vmem:[#allocation6 + $0x90] sm:$0xff]
    %v728 = vld [vmem:[#allocation6 + $0x98] sm:$0xff]
    %v729 = vld [vmem:[#allocation6 + $0xa0] sm:$0xff]
    %v730 = vld [vmem:[#allocation6 + $0xa8] sm:$0xff]
    %v731 = vld [vmem:[#allocation6 + $0xb0] sm:$0xff]
    %v732 = vld [vmem:[#allocation6 + $0xb8] sm:$0xff]
    %v733 = vld [vmem:[#allocation6 + $0xc0] sm:$0xff]
    %v734 = vld [vmem:[#allocation6 + $0xc8] sm:$0xff]
    %v735 = vld [vmem:[#allocation6 + $0xd0] sm:$0xff]
    %v736 = vld [vmem:[#allocation6 + $0xd8] sm:$0xff]
    %v737 = vld [vmem:[#allocation6 + $0xe0] sm:$0xff]
    %v738 = vld [vmem:[#allocation6 + $0xe8] sm:$0xff]
    %v739 = vld [vmem:[#allocation6 + $0xf0] sm:$0xff]
    %v740 = vld [vmem:[#allocation6 + $0xf8] sm:$0xff]
    %v741 = vld [vmem:[#allocation6 + $0x100] sm:$0xff]
    %v742 = vld [vmem:[#allocation6 + $0x108] sm:$0xff]
    %v743 = vld [vmem:[#allocation6 + $0x110] sm:$0xff]
    %v744 = vld [vmem:[#allocation6 + $0x118] sm:$0xff]
    %v745 = vld [vmem:[#allocation6 + $0x120] sm:$0xff]
    %v746 = vld [vmem:[#allocation6 + $0x128] sm:$0xff]
    %v747 = vld [vmem:[#allocation6 + $0x130] sm:$0xff]
    %v748 = vld [vmem:[#allocation6 + $0x138] sm:$0xff]
    %v749 = vld [vmem:[#allocation6 + $0x140] sm:$0xff]
    %v750 = vld [vmem:[#allocation6 + $0x148] sm:$0xff]
    %v751 = vld [vmem:[#allocation6 + $0x150] sm:$0xff]
    %v752 = vld [vmem:[#allocation6 + $0x158] sm:$0xff]
    %v753 = vld [vmem:[#allocation6 + $0x160] sm:$0xff]
    %v754 = vld [vmem:[#allocation6 + $0x168] sm:$0xff]
    %v755 = vld [vmem:[#allocation6 + $0x170] sm:$0xff]
    %v756 = vld [vmem:[#allocation6 + $0x178] sm:$0xff]
    %v757 = vld [vmem:[#allocation6 + $0x180] sm:$0xff]
    %v758 = vld [vmem:[#allocation6 + $0x188] sm:$0xff]
    %v759 = vld [vmem:[#allocation6 + $0x190] sm:$0xff]
    %v760 = vld [vmem:[#allocation6 + $0x198] sm:$0xff]
    %v761 = vld [vmem:[#allocation6 + $0x1a0] sm:$0xff]
    %v762 = vld [vmem:[#allocation6 + $0x1a8] sm:$0xff]
    %v763 = vld [vmem:[#allocation6 + $0x1b0] sm:$0xff]
    %v764 = vld [vmem:[#allocation6 + $0x1b8] sm:$0xff]
    %v765 = vld [vmem:[#allocation6 + $0x1c0] sm:$0xff]
    %v766 = vld [vmem:[#allocation6 + $0x1c8] sm:$0xff]
    %v767 = vld [vmem:[#allocation6 + $0x1d0] sm:$0xff]
    %v768 = vld [vmem:[#allocation6 + $0x1d8] sm:$0xff]
    %v769 = vld [vmem:[#allocation6 + $0x1e0] sm:$0xff]
    %v770 = vld [vmem:[#allocation6 + $0x1e8] sm:$0xff]
    %v771 = vld [vmem:[#allocation6 + $0x1f0] sm:$0xff]
    %v772 = vld [vmem:[#allocation6 + $0x1f8] sm:$0xff]
    %v773 = vunpack.c.l.s8.bf16 %v709
    %v774 = vunpack.c.l.s8.bf16 %v710
    %v775 = vunpack.c.l.s8.bf16 %v711
    %v776 = vunpack.c.l.s8.bf16 %v712
    %v777 = vunpack.c.h.s8.bf16 %v709
    %v778 = vunpack.c.h.s8.bf16 %v710
    %v779 = vunpack.c.h.s8.bf16 %v711
    %v780 = vunpack.c.h.s8.bf16 %v712
    %v781 = vunpack.c.l.s8.bf16 %v713
    %v782 = vunpack.c.l.s8.bf16 %v714
    %v783 = vunpack.c.l.s8.bf16 %v715
    %v784 = vunpack.c.l.s8.bf16 %v716
    %v785 = vunpack.c.h.s8.bf16 %v713
    %v786 = vunpack.c.h.s8.bf16 %v714
    %v787 = vunpack.c.h.s8.bf16 %v715
    %v788 = vunpack.c.h.s8.bf16 %v716
    %v789 = vunpack.c.l.s8.bf16 %v717
    %v790 = vunpack.c.l.s8.bf16 %v718
    %v791 = vunpack.c.l.s8.bf16 %v719
    %v792 = vunpack.c.l.s8.bf16 %v720
    %v793 = vunpack.c.h.s8.bf16 %v717
    %v794 = vunpack.c.h.s8.bf16 %v718
    %v795 = vunpack.c.h.s8.bf16 %v719
    %v796 = vunpack.c.h.s8.bf16 %v720
    %v797 = vunpack.c.l.s8.bf16 %v721
    %v798 = vunpack.c.l.s8.bf16 %v722
    %v799 = vunpack.c.l.s8.bf16 %v723
    %v800 = vunpack.c.l.s8.bf16 %v724
    %v801 = vunpack.c.h.s8.bf16 %v721
    %v802 = vunpack.c.h.s8.bf16 %v722
    %v803 = vunpack.c.h.s8.bf16 %v723
    %v804 = vunpack.c.h.s8.bf16 %v724
    %v805 = vunpack.c.l.s8.bf16 %v725
    %v806 = vunpack.c.l.s8.bf16 %v726
    %v807 = vunpack.c.l.s8.bf16 %v727
    %v808 = vunpack.c.l.s8.bf16 %v728
    %v809 = vunpack.c.h.s8.bf16 %v725
    %v810 = vunpack.c.h.s8.bf16 %v726
    %v811 = vunpack.c.h.s8.bf16 %v727
    %v812 = vunpack.c.h.s8.bf16 %v728
    %v813 = vunpack.c.l.s8.bf16 %v729
    %v814 = vunpack.c.l.s8.bf16 %v730
    %v815 = vunpack.c.l.s8.bf16 %v731
    %v816 = vunpack.c.l.s8.bf16 %v732
    %v817 = vunpack.c.h.s8.bf16 %v729
    %v818 = vunpack.c.h.s8.bf16 %v730
    %v819 = vunpack.c.h.s8.bf16 %v731
    %v820 = vunpack.c.h.s8.bf16 %v732
    %v821 = vunpack.c.l.s8.bf16 %v733
    %v822 = vunpack.c.l.s8.bf16 %v734
    %v823 = vunpack.c.l.s8.bf16 %v735
    %v824 = vunpack.c.l.s8.bf16 %v736
    %v825 = vunpack.c.h.s8.bf16 %v733
    %v826 = vunpack.c.h.s8.bf16 %v734
    %v827 = vunpack.c.h.s8.bf16 %v735
    %v828 = vunpack.c.h.s8.bf16 %v736
    %v829 = vunpack.c.l.s8.bf16 %v737
    %v830 = vunpack.c.l.s8.bf16 %v738
    %v831 = vunpack.c.l.s8.bf16 %v739
    %v832 = vunpack.c.l.s8.bf16 %v740
    %v833 = vunpack.c.h.s8.bf16 %v737
    %v834 = vunpack.c.h.s8.bf16 %v738
    %v835 = vunpack.c.h.s8.bf16 %v739
    %v836 = vunpack.c.h.s8.bf16 %v740
    %v837 = vunpack.c.l.s8.bf16 %v741
    %v838 = vunpack.c.l.s8.bf16 %v742
    %v839 = vunpack.c.l.s8.bf16 %v743
    %v840 = vunpack.c.l.s8.bf16 %v744
    %v841 = vunpack.c.h.s8.bf16 %v741
    %v842 = vunpack.c.h.s8.bf16 %v742
    %v843 = vunpack.c.h.s8.bf16 %v743
    %v844 = vunpack.c.h.s8.bf16 %v744
    %v845 = vunpack.c.l.s8.bf16 %v745
    %v846 = vunpack.c.l.s8.bf16 %v746
    %v847 = vunpack.c.l.s8.bf16 %v747
    %v848 = vunpack.c.l.s8.bf16 %v748
    %v849 = vunpack.c.h.s8.bf16 %v745
    %v850 = vunpack.c.h.s8.bf16 %v746
    %v851 = vunpack.c.h.s8.bf16 %v747
    %v852 = vunpack.c.h.s8.bf16 %v748
    %v853 = vunpack.c.l.s8.bf16 %v749
    %v854 = vunpack.c.l.s8.bf16 %v750
    %v855 = vunpack.c.l.s8.bf16 %v751
    %v856 = vunpack.c.l.s8.bf16 %v752
    %v857 = vunpack.c.h.s8.bf16 %v749
    %v858 = vunpack.c.h.s8.bf16 %v750
    %v859 = vunpack.c.h.s8.bf16 %v751
    %v860 = vunpack.c.h.s8.bf16 %v752
    %v861 = vunpack.c.l.s8.bf16 %v753
    %v862 = vunpack.c.l.s8.bf16 %v754
    %v863 = vunpack.c.l.s8.bf16 %v755
    %v864 = vunpack.c.l.s8.bf16 %v756
    %v865 = vunpack.c.h.s8.bf16 %v753
    %v866 = vunpack.c.h.s8.bf16 %v754
    %v867 = vunpack.c.h.s8.bf16 %v755
    %v868 = vunpack.c.h.s8.bf16 %v756
    %v869 = vunpack.c.l.s8.bf16 %v757
    %v870 = vunpack.c.l.s8.bf16 %v758
    %v871 = vunpack.c.l.s8.bf16 %v759
    %v872 = vunpack.c.l.s8.bf16 %v760
    %v873 = vunpack.c.h.s8.bf16 %v757
    %v874 = vunpack.c.h.s8.bf16 %v758
    %v875 = vunpack.c.h.s8.bf16 %v759
    %v876 = vunpack.c.h.s8.bf16 %v760
    %v877 = vunpack.c.l.s8.bf16 %v761
    %v878 = vunpack.c.l.s8.bf16 %v762
    %v879 = vunpack.c.l.s8.bf16 %v763
    %v880 = vunpack.c.l.s8.bf16 %v764
    %v881 = vunpack.c.h.s8.bf16 %v761
    %v882 = vunpack.c.h.s8.bf16 %v762
    %v883 = vunpack.c.h.s8.bf16 %v763
    %v884 = vunpack.c.h.s8.bf16 %v764
    %v885 = vunpack.c.l.s8.bf16 %v765
    %v886 = vunpack.c.l.s8.bf16 %v766
    %v887 = vunpack.c.l.s8.bf16 %v767
    %v888 = vunpack.c.l.s8.bf16 %v768
    %v889 = vunpack.c.h.s8.bf16 %v765
    %v890 = vunpack.c.h.s8.bf16 %v766
    %v891 = vunpack.c.h.s8.bf16 %v767
    %v892 = vunpack.c.h.s8.bf16 %v768
    %v893 = vunpack.c.l.s8.bf16 %v769
    %v894 = vunpack.c.l.s8.bf16 %v770
    %v895 = vunpack.c.l.s8.bf16 %v771
    %v896 = vunpack.c.l.s8.bf16 %v772
    %v897 = vunpack.c.h.s8.bf16 %v769
    %v898 = vunpack.c.h.s8.bf16 %v770
    %v899 = vunpack.c.h.s8.bf16 %v771
    %v900 = vunpack.c.h.s8.bf16 %v772
    %v901 = vpack.c.bf16 %v705, %v705
    %v902 = vpack.c.bf16 %v706, %v706
    %v903 = vpack.c.bf16 %v707, %v707
    %v904 = vpack.c.bf16 %v708, %v708
    %905 = vmatprep.subr.bf16.mxu0 %v774
    %906 = vmatpush1.bf16.msra.mxu0 %v773
    %907 = vmatprep.subr.bf16.mxu0 %v778
    %908 = vmatpush1.bf16.msra.mxu0 %v777
    %909 = vmatprep.subr.bf16.mxu0 %v782
    %910 = vmatpush1.bf16.msra.mxu0 %v781
    %911 = vmatprep.subr.bf16.mxu0 %v786
    %912 = vmatpush1.bf16.msra.mxu0 %v785
    %913 = vmatprep.subr.bf16.mxu0 %v790
    %914 = vmatpush1.bf16.msra.mxu0 %v789
    %915 = vmatprep.subr.bf16.mxu0 %v794
    %916 = vmatpush1.bf16.msra.mxu0 %v793
    %917 = vmatprep.subr.bf16.mxu0 %v798
    %918 = vmatpush1.bf16.msra.mxu0 %v797
    %919 = vmatprep.subr.bf16.mxu0 %v802
    %920 = vmatpush1.bf16.msra.mxu0 %v801
    %921 = vmatprep.subr.bf16.mxu0 %v806
    %922 = vmatpush1.bf16.msra.mxu0 %v805
    %923 = vmatprep.subr.bf16.mxu0 %v810
    %924 = vmatpush1.bf16.msra.mxu0 %v809
    %925 = vmatprep.subr.bf16.mxu0 %v814
    %926 = vmatpush1.bf16.msra.mxu0 %v813
    %927 = vmatprep.subr.bf16.mxu0 %v818
    %928 = vmatpush1.bf16.msra.mxu0 %v817
    %929 = vmatprep.subr.bf16.mxu0 %v822
    %930 = vmatpush1.bf16.msra.mxu0 %v821
    %931 = vmatprep.subr.bf16.mxu0 %v826
    %932 = vmatpush1.bf16.msra.mxu0 %v825
    %933 = vmatprep.subr.bf16.mxu0 %v830
    %934 = vmatpush1.bf16.msra.mxu0 %v829
    %935 = vmatprep.subr.bf16.mxu0 %v834
    %936 = vmatpush1.bf16.msra.mxu0 %v833
    %937 = vmatprep.mubr.bf16.mxu0 %v902
    %938 = vmatmul.mubr.bf16.gmra.mrb[0].mxu0 %v901
    %v939 = vpop.f32.mrb[0].mxu0
    %v940 = vadd.f32 0.0, %v939
    %v941 = vpop.f32.mrb[0].mxu0
    %v942 = vadd.f32 0.0, %v941
    %v943 = vpop.f32.mrb[0].mxu0
    %v944 = vpop.f32.mrb[0].mxu0
    %945 = vdwg.mxu0
    %946 = vmatprep.subr.bf16.mxu0 %v838
    %947 = vmatpush1.bf16.msra.mxu0 %v837
    %948 = vmatprep.subr.bf16.mxu0 %v842
    %949 = vmatpush1.bf16.msra.mxu0 %v841
    %950 = vmatprep.subr.bf16.mxu0 %v846
    %951 = vmatpush1.bf16.msra.mxu0 %v845
    %952 = vmatprep.subr.bf16.mxu0 %v850
    %953 = vmatpush1.bf16.msra.mxu0 %v849
    %954 = vmatprep.subr.bf16.mxu0 %v854
    %955 = vmatpush1.bf16.msra.mxu0 %v853
    %956 = vmatprep.subr.bf16.mxu0 %v858
    %957 = vmatpush1.bf16.msra.mxu0 %v857
    %958 = vmatprep.subr.bf16.mxu0 %v862
    %959 = vmatpush1.bf16.msra.mxu0 %v861
    %960 = vmatprep.subr.bf16.mxu0 %v866
    %961 = vmatpush1.bf16.msra.mxu0 %v865
    %962 = vmatprep.subr.bf16.mxu0 %v870
    %963 = vmatpush1.bf16.msra.mxu0 %v869
    %964 = vmatprep.subr.bf16.mxu0 %v874
    %965 = vmatpush1.bf16.msra.mxu0 %v873
    %966 = vmatprep.subr.bf16.mxu0 %v878
    %967 = vmatpush1.bf16.msra.mxu0 %v877
    %968 = vmatprep.subr.bf16.mxu0 %v882
    %969 = vmatpush1.bf16.msra.mxu0 %v881
    %970 = vmatprep.subr.bf16.mxu0 %v886
    %971 = vmatpush1.bf16.msra.mxu0 %v885
    %972 = vmatprep.subr.bf16.mxu0 %v890
    %973 = vmatpush1.bf16.msra.mxu0 %v889
    %974 = vmatprep.subr.bf16.mxu0 %v894
    %975 = vmatpush1.bf16.msra.mxu0 %v893
    %976 = vmatprep.subr.bf16.mxu0 %v898
    %977 = vmatpush1.bf16.msra.mxu0 %v897
    %978 = vmatprep.mubr.bf16.mxu0 %v904
    %979 = vmatmul.mubr.bf16.gmra.mrb[0].mxu0 %v903
    %v980 = vpop.f32.mrb[0].mxu0
    %v981 = vadd.f32 %v940, %v980
    %v982 = vpop.f32.mrb[0].mxu0
    %v983 = vadd.f32 %v942, %v982
    %v984 = vpop.f32.mrb[0].mxu0
    %v985 = vpop.f32.mrb[0].mxu0
    %986 = vdwg.mxu0
    %987 = vmatprep.subr.bf16.mxu0 %v776
    %988 = vmatpush1.bf16.msra.mxu0 %v775
    %989 = vmatprep.subr.bf16.mxu0 %v780
    %990 = vmatpush1.bf16.msra.mxu0 %v779
    %991 = vmatprep.subr.bf16.mxu0 %v784
    %992 = vmatpush1.bf16.msra.mxu0 %v783
    %993 = vmatprep.subr.bf16.mxu0 %v788
    %994 = vmatpush1.bf16.msra.mxu0 %v787
    %995 = vmatprep.subr.bf16.mxu0 %v792
    %996 = vmatpush1.bf16.msra.mxu0 %v791
    %997 = vmatprep.subr.bf16.mxu0 %v796
    %998 = vmatpush1.bf16.msra.mxu0 %v795
    %999 = vmatprep.subr.bf16.mxu0 %v800
    %1000 = vmatpush1.bf16.msra.mxu0 %v799
    %1001 = vmatprep.subr.bf16.mxu0 %v804
    %1002 = vmatpush1.bf16.msra.mxu0 %v803
    %1003 = vmatprep.subr.bf16.mxu0 %v808
    %1004 = vmatpush1.bf16.msra.mxu0 %v807
    %1005 = vmatprep.subr.bf16.mxu0 %v812
    %1006 = vmatpush1.bf16.msra.mxu0 %v811
    %1007 = vmatprep.subr.bf16.mxu0 %v816
    %1008 = vmatpush1.bf16.msra.mxu0 %v815
    %1009 = vmatprep.subr.bf16.mxu0 %v820
    %1010 = vmatpush1.bf16.msra.mxu0 %v819
    %1011 = vmatprep.subr.bf16.mxu0 %v824
    %1012 = vmatpush1.bf16.msra.mxu0 %v823
    %1013 = vmatprep.subr.bf16.mxu0 %v828
    %1014 = vmatpush1.bf16.msra.mxu0 %v827
    %1015 = vmatprep.subr.bf16.mxu0 %v832
    %1016 = vmatpush1.bf16.msra.mxu0 %v831
    %1017 = vmatprep.subr.bf16.mxu0 %v836
    %1018 = vmatpush1.bf16.msra.mxu0 %v835
    %1019 = vmatprep.mubr.bf16.mxu0 %v902
    %1020 = vmatmul.mubr.bf16.gmra.mrb[0].mxu0 %v901
    %v1021 = vpop.f32.mrb[0].mxu0
    %v1022 = vadd.f32 0.0, %v1021
    %v1023 = vpop.f32.mrb[0].mxu0
    %v1024 = vadd.f32 0.0, %v1023
    %v1025 = vpop.f32.mrb[0].mxu0
    %v1026 = vpop.f32.mrb[0].mxu0
    %1027 = vdwg.mxu0
    %1028 = vmatprep.subr.bf16.mxu0 %v840
    %1029 = vmatpush1.bf16.msra.mxu0 %v839
    %1030 = vmatprep.subr.bf16.mxu0 %v844
    %1031 = vmatpush1.bf16.msra.mxu0 %v843
    %1032 = vmatprep.subr.bf16.mxu0 %v848
    %1033 = vmatpush1.bf16.msra.mxu0 %v847
    %1034 = vmatprep.subr.bf16.mxu0 %v852
    %1035 = vmatpush1.bf16.msra.mxu0 %v851
    %1036 = vmatprep.subr.bf16.mxu0 %v856
    %1037 = vmatpush1.bf16.msra.mxu0 %v855
    %1038 = vmatprep.subr.bf16.mxu0 %v860
    %1039 = vmatpush1.bf16.msra.mxu0 %v859
    %1040 = vmatprep.subr.bf16.mxu0 %v864
    %1041 = vmatpush1.bf16.msra.mxu0 %v863
    %1042 = vmatprep.subr.bf16.mxu0 %v868
    %1043 = vmatpush1.bf16.msra.mxu0 %v867
    %1044 = vmatprep.subr.bf16.mxu0 %v872
    %1045 = vmatpush1.bf16.msra.mxu0 %v871
    %1046 = vmatprep.subr.bf16.mxu0 %v876
    %1047 = vmatpush1.bf16.msra.mxu0 %v875
    %1048 = vmatprep.subr.bf16.mxu0 %v880
    %1049 = vmatpush1.bf16.msra.mxu0 %v879
    %1050 = vmatprep.subr.bf16.mxu0 %v884
    %1051 = vmatpush1.bf16.msra.mxu0 %v883
    %1052 = vmatprep.subr.bf16.mxu0 %v888
    %1053 = vmatpush1.bf16.msra.mxu0 %v887
    %1054 = vmatprep.subr.bf16.mxu0 %v892
    %1055 = vmatpush1.bf16.msra.mxu0 %v891
    %1056 = vmatprep.subr.bf16.mxu0 %v896
    %1057 = vmatpush1.bf16.msra.mxu0 %v895
    %1058 = vmatprep.subr.bf16.mxu0 %v900
    %1059 = vmatpush1.bf16.msra.mxu0 %v899
    %1060 = vmatprep.mubr.bf16.mxu0 %v904
    %1061 = vmatmul.mubr.bf16.gmra.mrb[0].mxu0 %v903
    %v1062 = vpop.f32.mrb[0].mxu0
    %v1063 = vadd.f32 %v1022, %v1062
    %v1064 = vpop.f32.mrb[0].mxu0
    %v1065 = vadd.f32 %v1024, %v1064
    %v1066 = vpop.f32.mrb[0].mxu0
    %v1067 = vpop.f32.mrb[0].mxu0
    %1068 = vdwg.mxu0
    %v1069 = vld [vmem:[%s8] sm:$0xf]
    %v1071 = vlaneseq
    %v1072 = vshrl.u32 %v1071, 7
    %v1073 = vsub.s32 0, %v1072
    %v1074 = vrot.slane %v1069, %v1073
    %v1075 = vlaneseq
    %v1076 = vshrl.u32 %v1075, 7
    %v1077 = vsub.s32 1, %v1076
    %v1078 = vrot.slane %v1069, %v1077
    %v1079 = vlaneseq
    %v1080 = vshrl.u32 %v1079, 7
    %v1081 = vsub.s32 2, %v1080
    %v1082 = vrot.slane %v1069, %v1081
    %v1083 = vlaneseq
    %v1084 = vshrl.u32 %v1083, 7
    %v1085 = vsub.s32 3, %v1084
    %v1086 = vrot.slane %v1069, %v1085
    %v1091 = vmul.f32 %v981, %v1074
    %v1092 = vmul.f32 %v983, %v1078
    %v1093 = vmul.f32 %v1063, %v1082
    %v1094 = vmul.f32 %v1065, %v1086
    %v1095 = vld [vmem:[%s9] sm:$0xf]
    %v1097 = vlaneseq
    %v1098 = vshrl.u32 %v1097, 7
    %v1099 = vsub.s32 0, %v1098
    %v1100 = vrot.slane %v1095, %v1099
    %v1101 = vlaneseq
    %v1102 = vshrl.u32 %v1101, 7
    %v1103 = vsub.s32 1, %v1102
    %v1104 = vrot.slane %v1095, %v1103
    %v1105 = vlaneseq
    %v1106 = vshrl.u32 %v1105, 7
    %v1107 = vsub.s32 2, %v1106
    %v1108 = vrot.slane %v1095, %v1107
    %v1109 = vlaneseq
    %v1110 = vshrl.u32 %v1109, 7
    %v1111 = vsub.s32 3, %v1110
    %v1112 = vrot.slane %v1095, %v1111
    %v1117 = vadd.f32 %v1091, %v1100
    %v1118 = vadd.f32 %v1092, %v1104
    %v1119 = vadd.f32 %v1093, %v1108
    %v1120 = vadd.f32 %v1094, %v1112
    %v1121 = vmul.f32 %v1117, 0.01
    %v1122 = vmul.f32 %v1118, 0.01
    %v1123 = vmul.f32 %v1119, 0.01
    %v1124 = vmul.f32 %v1120, 0.01
    %v1125 = vmax.f32 %v1117, %v1121
    %v1126 = vmax.f32 %v1118, %v1122
    %v1127 = vmax.f32 %v1119, %v1123
    %v1128 = vmax.f32 %v1120, %v1124
    %v1129 = vpack.c.bf16 %v1125, %v1125
    %v1130 = vpack.c.bf16 %v1126, %v1126
    %v1131 = vpack.c.bf16 %v1127, %v1127
    %v1132 = vpack.c.bf16 %v1128, %v1128
    %v1133 = vld [vmem:[#allocation7] sm:$0xf]
    %v1134 = vld [vmem:[#allocation7 + $0x4] sm:$0xf]
    %v1135 = vld [vmem:[#allocation7 + $0x8] sm:$0xf]
    %v1136 = vld [vmem:[#allocation7 + $0xc] sm:$0xf]
    %v1137 = vld [vmem:[#allocation7 + $0x10] sm:$0xf]
    %v1138 = vld [vmem:[#allocation7 + $0x14] sm:$0xf]
    %v1139 = vld [vmem:[#allocation7 + $0x18] sm:$0xf]
    %v1140 = vld [vmem:[#allocation7 + $0x1c] sm:$0xf]
    %v1141 = vld [vmem:[#allocation7 + $0x20] sm:$0xf]
    %v1142 = vld [vmem:[#allocation7 + $0x24] sm:$0xf]
    %v1143 = vld [vmem:[#allocation7 + $0x28] sm:$0xf]
    %v1144 = vld [vmem:[#allocation7 + $0x2c] sm:$0xf]
    %v1145 = vld [vmem:[#allocation7 + $0x30] sm:$0xf]
    %v1146 = vld [vmem:[#allocation7 + $0x34] sm:$0xf]
    %v1147 = vld [vmem:[#allocation7 + $0x38] sm:$0xf]
    %v1148 = vld [vmem:[#allocation7 + $0x3c] sm:$0xf]
    %v1149 = vld [vmem:[#allocation7 + $0x40] sm:$0xf]
    %v1150 = vld [vmem:[#allocation7 + $0x44] sm:$0xf]
    %v1151 = vld [vmem:[#allocation7 + $0x48] sm:$0xf]
    %v1152 = vld [vmem:[#allocation7 + $0x4c] sm:$0xf]
    %v1153 = vld [vmem:[#allocation7 + $0x50] sm:$0xf]
    %v1154 = vld [vmem:[#allocation7 + $0x54] sm:$0xf]
    %v1155 = vld [vmem:[#allocation7 + $0x58] sm:$0xf]
    %v1156 = vld [vmem:[#allocation7 + $0x5c] sm:$0xf]
    %v1157 = vld [vmem:[#allocation7 + $0x60] sm:$0xf]
    %v1158 = vld [vmem:[#allocation7 + $0x64] sm:$0xf]
    %v1159 = vld [vmem:[#allocation7 + $0x68] sm:$0xf]
    %v1160 = vld [vmem:[#allocation7 + $0x6c] sm:$0xf]
    %v1161 = vld [vmem:[#allocation7 + $0x70] sm:$0xf]
    %v1162 = vld [vmem:[#allocation7 + $0x74] sm:$0xf]
    %v1163 = vld [vmem:[#allocation7 + $0x78] sm:$0xf]
    %v1164 = vld [vmem:[#allocation7 + $0x7c] sm:$0xf]
    %v1165 = vld [vmem:[#allocation7 + $0x80] sm:$0xf]
    %v1166 = vld [vmem:[#allocation7 + $0x84] sm:$0xf]
    %v1167 = vld [vmem:[#allocation7 + $0x88] sm:$0xf]
    %v1168 = vld [vmem:[#allocation7 + $0x8c] sm:$0xf]
    %v1169 = vld [vmem:[#allocation7 + $0x90] sm:$0xf]
    %v1170 = vld [vmem:[#allocation7 + $0x94] sm:$0xf]
    %v1171 = vld [vmem:[#allocation7 + $0x98] sm:$0xf]
    %v1172 = vld [vmem:[#allocation7 + $0x9c] sm:$0xf]
    %v1173 = vld [vmem:[#allocation7 + $0xa0] sm:$0xf]
    %v1174 = vld [vmem:[#allocation7 + $0xa4] sm:$0xf]
    %v1175 = vld [vmem:[#allocation7 + $0xa8] sm:$0xf]
    %v1176 = vld [vmem:[#allocation7 + $0xac] sm:$0xf]
    %v1177 = vld [vmem:[#allocation7 + $0xb0] sm:$0xf]
    %v1178 = vld [vmem:[#allocation7 + $0xb4] sm:$0xf]
    %v1179 = vld [vmem:[#allocation7 + $0xb8] sm:$0xf]
    %v1180 = vld [vmem:[#allocation7 + $0xbc] sm:$0xf]
    %v1181 = vld [vmem:[#allocation7 + $0xc0] sm:$0xf]
    %v1182 = vld [vmem:[#allocation7 + $0xc4] sm:$0xf]
    %v1183 = vld [vmem:[#allocation7 + $0xc8] sm:$0xf]
    %v1184 = vld [vmem:[#allocation7 + $0xcc] sm:$0xf]
    %v1185 = vld [vmem:[#allocation7 + $0xd0] sm:$0xf]
    %v1186 = vld [vmem:[#allocation7 + $0xd4] sm:$0xf]
    %v1187 = vld [vmem:[#allocation7 + $0xd8] sm:$0xf]
    %v1188 = vld [vmem:[#allocation7 + $0xdc] sm:$0xf]
    %v1189 = vld [vmem:[#allocation7 + $0xe0] sm:$0xf]
    %v1190 = vld [vmem:[#allocation7 + $0xe4] sm:$0xf]
    %v1191 = vld [vmem:[#allocation7 + $0xe8] sm:$0xf]
    %v1192 = vld [vmem:[#allocation7 + $0xec] sm:$0xf]
    %v1193 = vld [vmem:[#allocation7 + $0xf0] sm:$0xf]
    %v1194 = vld [vmem:[#allocation7 + $0xf4] sm:$0xf]
    %v1195 = vld [vmem:[#allocation7 + $0xf8] sm:$0xf]
    %v1196 = vld [vmem:[#allocation7 + $0xfc] sm:$0xf]
    %v1197 = vld [vmem:[%s11] sm:$0x1]
    %v1199 = vlaneseq
    %v1200 = vshrl.u32 %v1199, 7
    %v1201 = vsub.s32 0, %v1200
    %v1202 = vrot.slane %v1197, %v1201
    %v1268 = vunpack.c.l.b16 %v1133
    %v1269 = vunpack.c.l.b16 %v1134
    %v1270 = vunpack.c.l.b16 %v1135
    %v1271 = vunpack.c.l.b16 %v1136
    %v1272 = vunpack.c.l.b16 %v1137
    %v1273 = vunpack.c.l.b16 %v1138
    %v1274 = vunpack.c.l.b16 %v1139
    %v1275 = vunpack.c.l.b16 %v1140
    %v1276 = vunpack.c.l.b16 %v1141
    %v1277 = vunpack.c.l.b16 %v1142
    %v1278 = vunpack.c.l.b16 %v1143
    %v1279 = vunpack.c.l.b16 %v1144
    %v1280 = vunpack.c.l.b16 %v1145
    %v1281 = vunpack.c.l.b16 %v1146
    %v1282 = vunpack.c.l.b16 %v1147
    %v1283 = vunpack.c.l.b16 %v1148
    %v1284 = vunpack.c.l.b16 %v1149
    %v1285 = vunpack.c.l.b16 %v1150
    %v1286 = vunpack.c.l.b16 %v1151
    %v1287 = vunpack.c.l.b16 %v1152
    %v1288 = vunpack.c.l.b16 %v1153
    %v1289 = vunpack.c.l.b16 %v1154
    %v1290 = vunpack.c.l.b16 %v1155
    %v1291 = vunpack.c.l.b16 %v1156
    %v1292 = vunpack.c.l.b16 %v1157
    %v1293 = vunpack.c.l.b16 %v1158
    %v1294 = vunpack.c.l.b16 %v1159
    %v1295 = vunpack.c.l.b16 %v1160
    %v1296 = vunpack.c.l.b16 %v1161
    %v1297 = vunpack.c.l.b16 %v1162
    %v1298 = vunpack.c.l.b16 %v1163
    %v1299 = vunpack.c.l.b16 %v1164
    %v1300 = vunpack.c.l.b16 %v1165
    %v1301 = vunpack.c.l.b16 %v1166
    %v1302 = vunpack.c.l.b16 %v1167
    %v1303 = vunpack.c.l.b16 %v1168
    %v1304 = vunpack.c.l.b16 %v1169
    %v1305 = vunpack.c.l.b16 %v1170
    %v1306 = vunpack.c.l.b16 %v1171
    %v1307 = vunpack.c.l.b16 %v1172
    %v1308 = vunpack.c.l.b16 %v1173
    %v1309 = vunpack.c.l.b16 %v1174
    %v1310 = vunpack.c.l.b16 %v1175
    %v1311 = vunpack.c.l.b16 %v1176
    %v1312 = vunpack.c.l.b16 %v1177
    %v1313 = vunpack.c.l.b16 %v1178
    %v1314 = vunpack.c.l.b16 %v1179
    %v1315 = vunpack.c.l.b16 %v1180
    %v1316 = vunpack.c.l.b16 %v1181
    %v1317 = vunpack.c.l.b16 %v1182
    %v1318 = vunpack.c.l.b16 %v1183
    %v1319 = vunpack.c.l.b16 %v1184
    %v1320 = vunpack.c.l.b16 %v1185
    %v1321 = vunpack.c.l.b16 %v1186
    %v1322 = vunpack.c.l.b16 %v1187
    %v1323 = vunpack.c.l.b16 %v1188
    %v1324 = vunpack.c.l.b16 %v1189
    %v1325 = vunpack.c.l.b16 %v1190
    %v1326 = vunpack.c.l.b16 %v1191
    %v1327 = vunpack.c.l.b16 %v1192
    %v1328 = vunpack.c.l.b16 %v1193
    %v1329 = vunpack.c.l.b16 %v1194
    %v1330 = vunpack.c.l.b16 %v1195
    %v1331 = vunpack.c.l.b16 %v1196
    %v1332 = vpack.c.b16 %v1269, %v1268
    %v1333 = vpack.c.b16 %v1271, %v1270
    %v1334 = vpack.c.b16 %v1273, %v1272
    %v1335 = vpack.c.b16 %v1275, %v1274
    %v1336 = vpack.c.b16 %v1277, %v1276
    %v1337 = vpack.c.b16 %v1279, %v1278
    %v1338 = vpack.c.b16 %v1281, %v1280
    %v1339 = vpack.c.b16 %v1283, %v1282
    %v1340 = vpack.c.b16 %v1285, %v1284
    %v1341 = vpack.c.b16 %v1287, %v1286
    %v1342 = vpack.c.b16 %v1289, %v1288
    %v1343 = vpack.c.b16 %v1291, %v1290
    %v1344 = vpack.c.b16 %v1293, %v1292
    %v1345 = vpack.c.b16 %v1295, %v1294
    %v1346 = vpack.c.b16 %v1297, %v1296
    %v1347 = vpack.c.b16 %v1299, %v1298
    %v1348 = vpack.c.b16 %v1301, %v1300
    %v1349 = vpack.c.b16 %v1303, %v1302
    %v1350 = vpack.c.b16 %v1305, %v1304
    %v1351 = vpack.c.b16 %v1307, %v1306
    %v1352 = vpack.c.b16 %v1309, %v1308
    %v1353 = vpack.c.b16 %v1311, %v1310
    %v1354 = vpack.c.b16 %v1313, %v1312
    %v1355 = vpack.c.b16 %v1315, %v1314
    %v1356 = vpack.c.b16 %v1317, %v1316
    %v1357 = vpack.c.b16 %v1319, %v1318
    %v1358 = vpack.c.b16 %v1321, %v1320
    %v1359 = vpack.c.b16 %v1323, %v1322
    %v1360 = vpack.c.b16 %v1325, %v1324
    %v1361 = vpack.c.b16 %v1327, %v1326
    %v1362 = vpack.c.b16 %v1329, %v1328
    %v1363 = vpack.c.b16 %v1331, %v1330
    %1396 = vmatprep.subr.bf16.mxu0 0
    %1397 = vmatpush1.bf16.msra.mxu0 %v1332
    %1398 = vmatprep.subr.bf16.mxu0 0
    %1399 = vmatpush1.bf16.msra.mxu0 %v1333
    %1400 = vmatprep.subr.bf16.mxu0 0
    %1401 = vmatpush1.bf16.msra.mxu0 %v1334
    %1402 = vmatprep.subr.bf16.mxu0 0
    %1403 = vmatpush1.bf16.msra.mxu0 %v1335
    %1404 = vmatprep.subr.bf16.mxu0 0
    %1405 = vmatpush1.bf16.msra.mxu0 %v1336
    %1406 = vmatprep.subr.bf16.mxu0 0
    %1407 = vmatpush1.bf16.msra.mxu0 %v1337
    %1408 = vmatprep.subr.bf16.mxu0 0
    %1409 = vmatpush1.bf16.msra.mxu0 %v1338
    %1410 = vmatprep.subr.bf16.mxu0 0
    %1411 = vmatpush1.bf16.msra.mxu0 %v1339
    %1412 = vmatprep.subr.bf16.mxu0 0
    %1413 = vmatpush1.bf16.msra.mxu0 %v1340
    %1414 = vmatprep.subr.bf16.mxu0 0
    %1415 = vmatpush1.bf16.msra.mxu0 %v1341
    %1416 = vmatprep.subr.bf16.mxu0 0
    %1417 = vmatpush1.bf16.msra.mxu0 %v1342
    %1418 = vmatprep.subr.bf16.mxu0 0
    %1419 = vmatpush1.bf16.msra.mxu0 %v1343
    %1420 = vmatprep.subr.bf16.mxu0 0
    %1421 = vmatpush1.bf16.msra.mxu0 %v1344
    %1422 = vmatprep.subr.bf16.mxu0 0
    %1423 = vmatpush1.bf16.msra.mxu0 %v1345
    %1424 = vmatprep.subr.bf16.mxu0 0
    %1425 = vmatpush1.bf16.msra.mxu0 %v1346
    %1426 = vmatprep.subr.bf16.mxu0 0
    %1427 = vmatpush1.bf16.msra.mxu0 %v1347
    %1428 = vmatprep.mubr.bf16.mxu0 %v1130
    %1429 = vmatmul.mubr.bf16.gmra.mrb[0].mxu0 %v1129
    %v1430 = vpop.f32.mrb[0].mxu0
    %v1431 = vadd.f32 %v1202, %v1430
    %v1432 = vpop.f32.mrb[0].mxu0
    %v1433 = vpop.f32.mrb[0].mxu0
    %v1434 = vpop.f32.mrb[0].mxu0
    %1435 = vdwg.mxu0
    %1436 = vmatprep.subr.bf16.mxu0 0
    %1437 = vmatpush1.bf16.msra.mxu0 %v1348
    %1438 = vmatprep.subr.bf16.mxu0 0
    %1439 = vmatpush1.bf16.msra.mxu0 %v1349
    %1440 = vmatprep.subr.bf16.mxu0 0
    %1441 = vmatpush1.bf16.msra.mxu0 %v1350
    %1442 = vmatprep.subr.bf16.mxu0 0
    %1443 = vmatpush1.bf16.msra.mxu0 %v1351
    %1444 = vmatprep.subr.bf16.mxu0 0
    %1445 = vmatpush1.bf16.msra.mxu0 %v1352
    %1446 = vmatprep.subr.bf16.mxu0 0
    %1447 = vmatpush1.bf16.msra.mxu0 %v1353
    %1448 = vmatprep.subr.bf16.mxu0 0
    %1449 = vmatpush1.bf16.msra.mxu0 %v1354
    %1450 = vmatprep.subr.bf16.mxu0 0
    %1451 = vmatpush1.bf16.msra.mxu0 %v1355
    %1452 = vmatprep.subr.bf16.mxu0 0
    %1453 = vmatpush1.bf16.msra.mxu0 %v1356
    %1454 = vmatprep.subr.bf16.mxu0 0
    %1455 = vmatpush1.bf16.msra.mxu0 %v1357
    %1456 = vmatprep.subr.bf16.mxu0 0
    %1457 = vmatpush1.bf16.msra.mxu0 %v1358
    %1458 = vmatprep.subr.bf16.mxu0 0
    %1459 = vmatpush1.bf16.msra.mxu0 %v1359
    %1460 = vmatprep.subr.bf16.mxu0 0
    %1461 = vmatpush1.bf16.msra.mxu0 %v1360
    %1462 = vmatprep.subr.bf16.mxu0 0
    %1463 = vmatpush1.bf16.msra.mxu0 %v1361
    %1464 = vmatprep.subr.bf16.mxu0 0
    %1465 = vmatpush1.bf16.msra.mxu0 %v1362
    %1466 = vmatprep.subr.bf16.mxu0 0
    %1467 = vmatpush1.bf16.msra.mxu0 %v1363
    %1468 = vmatprep.mubr.bf16.mxu0 %v1132
    %1469 = vmatmul.mubr.bf16.gmra.mrb[0].mxu0 %v1131
    %v1470 = vpop.f32.mrb[0].mxu0
    %v1471 = vadd.f32 %v1431, %v1470
    %v1472 = vpop.f32.mrb[0].mxu0
    %v1473 = vpop.f32.mrb[0].mxu0
    %v1474 = vpop.f32.mrb[0].mxu0
    %1475 = vdwg.mxu0
    %v1476 = vtanh.pop %v1471
    %1477 = vst [vmem:[%s12] sm:$0xff] %v1476
    // Predicated region
    $region66: #{actor_forward.1} parent=1 // pred_check
      _
    $region67: #{actor_forward.1} parent=1 // pred_check_branch
      %1479 = sbr.rel (0) target = $region69
    $region68: #{actor_forward.1} parent=1 // pred_region
      _
    $region69: #{actor_forward.1} parent=1 // pred_fallthru
      _
    // Predicated region
    $region70: #{actor_forward.1} parent=1 // pred_check
      _
    $region71: #{actor_forward.1} parent=1 // pred_check_branch
      %1481 = sbr.rel (0) target = $region73
    $region72: #{actor_forward.1} parent=1 // pred_region
      _
    $region73: #{actor_forward.1} parent=1 // pred_fallthru
      _
    %1482 = vsyncpa [#allocation3], 1
    %1483 = vsyncpa [#allocation5], 1
    %1484 = vsyncpa [#allocation8], 1

</llo_original>
